<compile_context>
chip_gen: v7x
topology: tpu7x:2x2x1
jax: 0.10.0
libtpu: 0.0.40
codegen_flags: <defaults>
</compile_context>

<pallas_src>
import functools

import jax
import jax.numpy as jnp
from jax.experimental import pallas as pl
from jax.experimental.pallas import tpu as pltpu


def _round_up(x, m):
    return (x + m - 1) // m * m


def _pick_cout_tile(cout_p, max_tile=256):
    """Largest lane-dense (multiple-of-128) Cout tile <= max_tile dividing cout_p."""
    tc = min(max_tile, cout_p)
    while cout_p % tc:
        tc -= 128
    return tc


def _vmem_limit_bytes():
    """Generation-aware scoped-VMEM request: ~3/4 of physical, capped at 96 MiB
    (v5e/v6e: 128 MiB physical -> 96 MiB; v7x: 64 MiB physical -> 48 MiB)."""
    try:
        cap = int(pltpu.get_tpu_info().vmem_capacity_bytes)
    except Exception:
        cap = 64 * 1024 * 1024
    return max(32 * 1024 * 1024, min(96 * 1024 * 1024, (cap * 3) // 4))


def _conv_group_kernel(tap_ref, x_ref, w_ref, b_ref, o_ref, acc_ref, y_ref, *,
                       hout, wout, relu):
    """One (conv, kw) tap column of a (possibly fused) 3x3 convolution.

    Grid: (batch, cout_tiles, tap_columns); this body runs one tap column.

    tap_ref: SMEM (n_groups, 4) i32 -- [ro_kh0, ro_kh1, ro_kh2, co] per column
    x_ref:   VMEM (Hp, Wp8, Cin)    bf16 padded input (one batch sample)
    w_ref:   VMEM (3, Cin, Tc)      bf16 weights: the 3 kh taps of this column
    b_ref:   VMEM (1, Tc)           f32 summed bias
    o_ref:   VMEM (Hout, Wout, Tc)  output tile
    acc_ref: VMEM (Hout, Wout, Tc)  f32 accumulator (persists across columns)
    y_ref:   VMEM (Hout, Wp8, Tc)   f32 full-width per-column partial sum
    """
    g = pl.program_id(2)
    n_groups = pl.num_programs(2)

    wp = x_ref.shape[1]
    cin = x_ref.shape[2]
    tc = w_ref.shape[2]
    rows = hout * wp

    # Initialize the accumulator with the broadcast bias (saves one full pass).
    @pl.when(g == 0)
    def _():
        acc_ref[...] = jnp.broadcast_to(b_ref[...].reshape(1, 1, tc),
                                        acc_ref.shape)

    # Three kh taps: H-slab slices only (outer dim, no sublane relayout) and
    # matmuls over the FULL padded width, summed in an f32 VMEM scratch so no
    # value-carried accumulator spills around the MXU pushes.
    for kh in range(3):
        ro = tap_ref[g, kh]
        xs = x_ref[pl.ds(ro, hout), :, :].reshape(rows, cin)
        part = jnp.dot(xs, w_ref[kh], preferred_element_type=jnp.float32)
        part = part.reshape(hout, wp, tc)
        if kh == 0:
            y_ref[...] = part
        else:
            y_ref[...] += part

    # Single W-offset slice per tap column (on the small f32 result), dropping
    # the halo columns while accumulating.
    co = tap_ref[g, 3]
    acc_ref[...] += y_ref[:, pl.ds(co, wout), :]

    # Finalize: optional ReLU, downcast, lane-dense store.
    @pl.when(g == n_groups - 1)
    def _():
        r = acc_ref[...]
        if relu:
            r = jnp.maximum(r, 0.0)
        o_ref[...] = r.astype(o_ref.dtype)


def conv3x3_fused_nhwc(x, convs, *, relu, out_dtype, cout_tile=256):
    """Sum of one or more 3x3 / stride-1 convolutions of the same input.

    x:     (B, H, W, Cin) float array (cast to bf16 internally).
    convs: list of (w_oihw, bias, padding, dilation); all entries must share
           Cout and the same output spatial size H + 2p - 2d.  Their outputs
           (and biases) are summed, with an optional fused ReLU.
    Returns (B, Hout, Wout, Cout) in `out_dtype`.
    """
    B, H, W, Cin = x.shape
    Cout = convs[0][0].shape[0]
    p0, d0 = convs[0][2], convs[0][3]
    Hout = H + 2 * p0 - 2 * d0
    Wout = W + 2 * p0 - 2 * d0
    pmax = max(c[2] for c in convs)
    for (w, b, p, d) in convs:
        assert w.shape == (Cout, Cin, 3, 3)
        assert b.shape == (Cout,)
        assert H + 2 * p - 2 * d == Hout and W + 2 * p - 2 * d == Wout
        assert pmax - p + 2 * d <= 2 * pmax, "tap offsets must stay inside halo"

    cin_p = _round_up(Cin, 128)
    cout_p = _round_up(Cout, 128)
    Hp = H + 2 * pmax
    Wp = W + 2 * pmax
    Wp8 = _round_up(Wp, 8)            # sublane-aligned padded width

    # Pad + cast the input once: spatial halo, sublane-aligned width, lane-dense
    # channels.  TODO(synk): fuse this pad+cast into the producing layer's
    # output store to avoid one HBM round trip of the activation per layer.
    xp = jnp.pad(x.astype(jnp.bfloat16),
                 ((0, 0), (pmax, pmax), (pmax, Wp8 - W - pmax),
                  (0, cin_p - Cin)))

    # Tap columns: one per (conv, kw); each carries its 3 kh taps.
    w_rows = []
    tap_tbl = []
    bias = jnp.zeros((cout_p,), jnp.float32)
    for (w, b, p, d) in convs:
        off = pmax - p
        w_t = jnp.transpose(w.astype(jnp.float32), (2, 3, 1, 0))  # (kh,kw,Ci,Co)
        w_t = jnp.pad(w_t, ((0, 0), (0, 0), (0, cin_p - Cin),
                            (0, cout_p - Cout))).astype(jnp.bfloat16)
        bias = bias + jnp.pad(b.astype(jnp.float32), (0, cout_p - Cout))
        for kw in range(3):
            w_rows.append(w_t[:, kw])                    # (3, cin_p, cout_p)
            tap_tbl.append([off + 0 * d, off + 1 * d, off + 2 * d,
                            off + kw * d])
    n_groups = len(w_rows)
    w_all = jnp.concatenate(w_rows, axis=0)              # (3*n_groups, cin_p, cout_p)
    taps = jnp.array(tap_tbl, dtype=jnp.int32)           # (n_groups, 4)
    bias2 = bias.reshape(1, cout_p)

    tc = _pick_cout_tile(cout_p, cout_tile)
    grid = (B, cout_p // tc, n_groups)

    kernel = functools.partial(_conv_group_kernel, hout=Hout, wout=Wout,
                               relu=relu)
    # TODO(synk): for large feature maps add an Hout row-slab grid axis with a
    # halo'd manual DMA so the per-sample input block stays bounded.
    out = pl.pallas_call(
        kernel,
        out_shape=jax.ShapeDtypeStruct((B, Hout, Wout, cout_p), out_dtype),
        grid_spec=pltpu.PrefetchScalarGridSpec(
            num_scalar_prefetch=1,
            grid=grid,
            in_specs=[
                # one sample's padded feature map per (parallel) batch step
                pl.BlockSpec((None, Hp, Wp8, cin_p),
                             lambda bi, ci, g, taps: (bi, 0, 0, 0)),
                # one (conv, kw) weight column per tap step -> small blocks the
                # pipeline double-buffers behind the matmuls
                pl.BlockSpec((3, cin_p, tc),
                             lambda bi, ci, g, taps: (g, 0, ci)),
                pl.BlockSpec((1, tc), lambda bi, ci, g, taps: (0, ci)),
            ],
            out_specs=pl.BlockSpec((None, Hout, Wout, tc),
                                   lambda bi, ci, g, taps: (bi, 0, 0, ci)),
            scratch_shapes=[
                pltpu.VMEM((Hout, Wout, tc), jnp.float32),   # output accumulator
                pltpu.VMEM((Hout, Wp8, tc), jnp.float32),    # full-width column sum
            ],
        ),
        compiler_params=pltpu.CompilerParams(
            dimension_semantics=("parallel", "parallel", "arbitrary"),
            vmem_limit_bytes=_vmem_limit_bytes()),
    )(taps, xp, w_all, bias2)

    if cout_p != Cout:
        out = out[..., :Cout]
    return out


def init_params(key, dilation_series, num_classes):
    """Deterministic synthetic parameters matching Classifier_Module.__init__."""
    backbone_dims = [(70, 128), (128, 256), (256, 512), (512, 512), (512, 1024)]
    keys = jax.random.split(key, len(backbone_dims) + len(dilation_series))
    backbone = []
    for i, (cin, cout) in enumerate(backbone_dims):
        wk, bk = jax.random.split(keys[i])
        std = 1.0 / jnp.sqrt(9.0 * cin)
        w = jax.random.normal(wk, (cout, cin, 3, 3), jnp.float32) * std
        b = jax.random.normal(bk, (cout,), jnp.float32) * 0.01
        backbone.append((w, b))
    classifiers = []
    for j in range(len(dilation_series)):
        wk, bk = jax.random.split(keys[len(backbone_dims) + j])
        # module: m.weight.data.normal_(0, 0.01); bias default-initialized.
        w = jax.random.normal(wk, (num_classes, 1024, 3, 3), jnp.float32) * 0.01
        b = jax.random.normal(bk, (num_classes,), jnp.float32) * 0.01
        classifiers.append((w, b))
    return backbone, classifiers


def classifier_module_forward(x_nchw, backbone, classifiers,
                              dilation_series, padding_series):
    """Pallas implementation of Classifier_Module.forward (NCHW in / NCHW out)."""
    x = jnp.transpose(x_nchw, (0, 2, 3, 1))           # NCHW -> NHWC
    for w, b in backbone:
        x = conv3x3_fused_nhwc(x, [(w, b, 1, 1)], relu=True,
                               out_dtype=jnp.bfloat16)
    out5 = x
    # PyTorch forward: out = conv2d_list[0](out_5), then the loop body runs
    # once and early-returns, i.e. out += conv2d_list[1](out_5).  Only the
    # first two dilated convs contribute; they are fused into one kernel call.
    n_used = min(2, len(classifiers))
    fused = [(classifiers[i][0], classifiers[i][1],
              padding_series[i], dilation_series[i]) for i in range(n_used)]
    out = conv3x3_fused_nhwc(out5, fused, relu=False, out_dtype=jnp.float32)
    return jnp.transpose(out, (0, 3, 1, 2))           # NHWC -> NCHW


def _conv_ref(x, w, b, *, padding, dilation):
    out = jax.lax.conv_general_dilated(
        x, w, window_strides=(1, 1),
        padding=[(padding, padding), (padding, padding)],
        rhs_dilation=(dilation, dilation),
        dimension_numbers=("NCHW", "OIHW", "NCHW"))
    return out + b[None, :, None, None]


def classifier_module_reference(x, backbone, classifiers,
                                dilation_series, padding_series):
    h = x
    for w, b in backbone:
        h = jax.nn.relu(_conv_ref(h, w, b, padding=1, dilation=1))
    out = _conv_ref(h, classifiers[0][0], classifiers[0][1],
                    padding=padding_series[0], dilation=dilation_series[0])
    if len(classifiers) > 1:
        out = out + _conv_ref(h, classifiers[1][0], classifiers[1][1],
                              padding=padding_series[1],
                              dilation=dilation_series[1])
    return out


if __name__ == "__main__":
    dilation_series = [2, 4, 6, 8]
    padding_series = [2, 4, 6, 8]
    num_classes = 5

    key = jax.random.PRNGKey(0)
    kp, kx = jax.random.split(key)
    backbone, classifiers = init_params(kp, dilation_series, num_classes)

    # Small input consistent with conv1 (70 input channels), NCHW.
    x = jax.random.normal(kx, (2, 70, 16, 16), jnp.float32)

    out = classifier_module_forward(x, backbone, classifiers,
                                    dilation_series, padding_series)
    out = jax.block_until_ready(out)

    ref = classifier_module_reference(x, backbone, classifiers,
                                      dilation_series, padding_series)
    ref = jax.block_until_ready(ref)

    assert out.shape == (2, num_classes, 16, 16), out.shape
    # bf16 operands / activations with f32 accumulation vs f32 reference.
    err = float(jnp.max(jnp.abs(out - ref)))
    scale = float(jnp.max(jnp.abs(ref)))
    assert err <= 0.05 * scale + 1e-3, (err, scale)

    print("KERNEL_OK")
</pallas_src>

<mosaic_0001>
module attributes {stable_mosaic.version = 11 : i64} {
  func.func @_conv_group_kernel(%arg0: i32, %arg1: i32, %arg2: i32, %arg3: memref<3x4xi32, #tpu.memory_space<smem>>, %arg4: memref<1x18x24x128xbf16, #tpu.memory_space<vmem>>, %arg5: memref<3x128x128xbf16, #tpu.memory_space<vmem>>, %arg6: memref<1x128xf32, #tpu.memory_space<vmem>>, %arg7: memref<1x16x16x128xbf16, #tpu.memory_space<vmem>>, %arg8: memref<16x16x128xf32, #tpu.memory_space<vmem>>, %arg9: memref<16x24x128xf32, #tpu.memory_space<vmem>>) attributes {dimension_semantics = [#tpu.dimension_semantics<parallel>, #tpu.dimension_semantics<parallel>, #tpu.dimension_semantics<arbitrary>], iteration_bounds = array<i64: 2, 1, 3>, scalar_prefetch = 1 : i64, scratch_operands = 2 : i64, tpu.core_type = #tpu.core_type<tc>, window_params = [{transform_indices = @transform_0, window_bounds = array<i64: 1, 18, 24, 128>}, {transform_indices = @transform_1, window_bounds = array<i64: 3, 128, 128>}, {transform_indices = @transform_2, window_bounds = array<i64: 1, 128>}, {transform_indices = @transform_3, window_bounds = array<i64: 1, 16, 16, 128>}]} {
    %c0_i32 = arith.constant 0 : i32
    %0 = arith.cmpi eq, %arg2, %c0_i32 : i32
    %1 = arith.extui %0 : i1 to i32
    %c0_i32_0 = arith.constant 0 : i32
    %2 = arith.cmpi ne, %1, %c0_i32_0 : i32
    scf.if %2 {
      %c0_45 = arith.constant 0 : index
      %c0_46 = arith.constant 0 : index
      %50 = vector.load %arg6[%c0_45, %c0_46] : memref<1x128xf32, #tpu.memory_space<vmem>>, vector<1x128xf32>
      %51 = vector.shape_cast %50 : vector<1x128xf32> to vector<1x1x128xf32>
      %52 = vector.shape_cast %51 : vector<1x1x128xf32> to vector<1x1x128xf32>
      %53 = vector.broadcast %52 : vector<1x1x128xf32> to vector<16x16x128xf32>
      %c0_47 = arith.constant 0 : index
      %c0_48 = arith.constant 0 : index
      %c0_49 = arith.constant 0 : index
      %54 = vector.load %arg8[%c0_47, %c0_48, %c0_49] : memref<16x16x128xf32, #tpu.memory_space<vmem>>, vector<16x16x128xf32>
      tpu.vector_store %arg8[%c0_47, %c0_48, %c0_49], %53 {strides = array<i32>} : memref<16x16x128xf32, #tpu.memory_space<vmem>>, vector<16x16x128xf32>,
    } else {
    }
    %3 = arith.index_cast %arg2 : i32 to index
    %c0 = arith.constant 0 : index
    %4 = memref.load %arg3[%3, %c0] : memref<3x4xi32, #tpu.memory_space<smem>>
    %c0_1 = arith.constant 0 : index
    %5 = arith.index_cast %4 : i32 to index
    %c0_2 = arith.constant 0 : index
    %c0_3 = arith.constant 0 : index
    %6 = vector.load %arg4[%c0_1, %5, %c0_2, %c0_3] : memref<1x18x24x128xbf16, #tpu.memory_space<vmem>>, vector<1x16x24x128xbf16>
    %7 = vector.shape_cast %6 : vector<1x16x24x128xbf16> to vector<16x24x128xbf16>
    %8 = vector.shape_cast %7 : vector<16x24x128xbf16> to vector<384x128xbf16>
    %c0_4 = arith.constant 0 : index
    %c0_5 = arith.constant 0 : index
    %c0_6 = arith.constant 0 : index
    %9 = vector.load %arg5[%c0_4, %c0_5, %c0_6] : memref<3x128x128xbf16, #tpu.memory_space<vmem>>, vector<1x128x128xbf16>
    %10 = vector.shape_cast %9 : vector<1x128x128xbf16> to vector<128x128xbf16>
    %cst = arith.constant dense<0.000000e+00> : vector<384x128xf32>
    %11 = tpu.matmul %8, %10, %cst {dimension_numbers = #tpu.dot_dimension_numbers<[1], [0], [0], [1], [0, 0, 1, 1], [], []>} : vector<384x128xbf16>, vector<128x128xbf16>, vector<384x128xf32> -> vector<384x128xf32>
    %12 = vector.shape_cast %11 : vector<384x128xf32> to vector<16x24x128xf32>
    %c0_7 = arith.constant 0 : index
    %c0_8 = arith.constant 0 : index
    %c0_9 = arith.constant 0 : index
    %13 = vector.load %arg9[%c0_7, %c0_8, %c0_9] : memref<16x24x128xf32, #tpu.memory_space<vmem>>, vector<16x24x128xf32>
    tpu.vector_store %arg9[%c0_7, %c0_8, %c0_9], %12 {strides = array<i32>} : memref<16x24x128xf32, #tpu.memory_space<vmem>>, vector<16x24x128xf32>,
    %14 = arith.index_cast %arg2 : i32 to index
    %c1 = arith.constant 1 : index
    %15 = memref.load %arg3[%14, %c1] : memref<3x4xi32, #tpu.memory_space<smem>>
    %c0_10 = arith.constant 0 : index
    %16 = arith.index_cast %15 : i32 to index
    %c0_11 = arith.constant 0 : index
    %c0_12 = arith.constant 0 : index
    %17 = vector.load %arg4[%c0_10, %16, %c0_11, %c0_12] : memref<1x18x24x128xbf16, #tpu.memory_space<vmem>>, vector<1x16x24x128xbf16>
    %18 = vector.shape_cast %17 : vector<1x16x24x128xbf16> to vector<16x24x128xbf16>
    %19 = vector.shape_cast %18 : vector<16x24x128xbf16> to vector<384x128xbf16>
    %c1_13 = arith.constant 1 : index
    %c0_14 = arith.constant 0 : index
    %c0_15 = arith.constant 0 : index
    %20 = vector.load %arg5[%c1_13, %c0_14, %c0_15] : memref<3x128x128xbf16, #tpu.memory_space<vmem>>, vector<1x128x128xbf16>
    %21 = vector.shape_cast %20 : vector<1x128x128xbf16> to vector<128x128xbf16>
    %cst_16 = arith.constant dense<0.000000e+00> : vector<384x128xf32>
    %22 = tpu.matmul %19, %21, %cst_16 {dimension_numbers = #tpu.dot_dimension_numbers<[1], [0], [0], [1], [0, 0, 1, 1], [], []>} : vector<384x128xbf16>, vector<128x128xbf16>, vector<384x128xf32> -> vector<384x128xf32>
    %23 = vector.shape_cast %22 : vector<384x128xf32> to vector<16x24x128xf32>
    %c0_17 = arith.constant 0 : index
    %c0_18 = arith.constant 0 : index
    %c0_19 = arith.constant 0 : index
    %24 = vector.load %arg9[%c0_17, %c0_18, %c0_19] : memref<16x24x128xf32, #tpu.memory_space<vmem>>, vector<16x24x128xf32>
    %25 = arith.addf %24, %23 : vector<16x24x128xf32>
    %c0_20 = arith.constant 0 : index
    %c0_21 = arith.constant 0 : index
    %c0_22 = arith.constant 0 : index
    %26 = vector.load %arg9[%c0_20, %c0_21, %c0_22] : memref<16x24x128xf32, #tpu.memory_space<vmem>>, vector<16x24x128xf32>
    tpu.vector_store %arg9[%c0_20, %c0_21, %c0_22], %25 {strides = array<i32>} : memref<16x24x128xf32, #tpu.memory_space<vmem>>, vector<16x24x128xf32>,
    %27 = arith.index_cast %arg2 : i32 to index
    %c2 = arith.constant 2 : index
    %28 = memref.load %arg3[%27, %c2] : memref<3x4xi32, #tpu.memory_space<smem>>
    %c0_23 = arith.constant 0 : index
    %29 = arith.index_cast %28 : i32 to index
    %c0_24 = arith.constant 0 : index
    %c0_25 = arith.constant 0 : index
    %30 = vector.load %arg4[%c0_23, %29, %c0_24, %c0_25] : memref<1x18x24x128xbf16, #tpu.memory_space<vmem>>, vector<1x16x24x128xbf16>
    %31 = vector.shape_cast %30 : vector<1x16x24x128xbf16> to vector<16x24x128xbf16>
    %32 = vector.shape_cast %31 : vector<16x24x128xbf16> to vector<384x128xbf16>
    %c2_26 = arith.constant 2 : index
    %c0_27 = arith.constant 0 : index
    %c0_28 = arith.constant 0 : index
    %33 = vector.load %arg5[%c2_26, %c0_27, %c0_28] : memref<3x128x128xbf16, #tpu.memory_space<vmem>>, vector<1x128x128xbf16>
    %34 = vector.shape_cast %33 : vector<1x128x128xbf16> to vector<128x128xbf16>
    %cst_29 = arith.constant dense<0.000000e+00> : vector<384x128xf32>
    %35 = tpu.matmul %32, %34, %cst_29 {dimension_numbers = #tpu.dot_dimension_numbers<[1], [0], [0], [1], [0, 0, 1, 1], [], []>} : vector<384x128xbf16>, vector<128x128xbf16>, vector<384x128xf32> -> vector<384x128xf32>
    %36 = vector.shape_cast %35 : vector<384x128xf32> to vector<16x24x128xf32>
    %c0_30 = arith.constant 0 : index
    %c0_31 = arith.constant 0 : index
    %c0_32 = arith.constant 0 : index
    %37 = vector.load %arg9[%c0_30, %c0_31, %c0_32] : memref<16x24x128xf32, #tpu.memory_space<vmem>>, vector<16x24x128xf32>
    %38 = arith.addf %37, %36 : vector<16x24x128xf32>
    %c0_33 = arith.constant 0 : index
    %c0_34 = arith.constant 0 : index
    %c0_35 = arith.constant 0 : index
    %39 = vector.load %arg9[%c0_33, %c0_34, %c0_35] : memref<16x24x128xf32, #tpu.memory_space<vmem>>, vector<16x24x128xf32>
    tpu.vector_store %arg9[%c0_33, %c0_34, %c0_35], %38 {strides = array<i32>} : memref<16x24x128xf32, #tpu.memory_space<vmem>>, vector<16x24x128xf32>,
    %40 = arith.index_cast %arg2 : i32 to index
    %c3 = arith.constant 3 : index
    %41 = memref.load %arg3[%40, %c3] : memref<3x4xi32, #tpu.memory_space<smem>>
    %c0_36 = arith.constant 0 : index
    %c0_37 = arith.constant 0 : index
    %c0_38 = arith.constant 0 : index
    %42 = vector.load %arg8[%c0_36, %c0_37, %c0_38] : memref<16x16x128xf32, #tpu.memory_space<vmem>>, vector<16x16x128xf32>
    %c0_39 = arith.constant 0 : index
    %43 = arith.index_cast %41 : i32 to index
    %c0_40 = arith.constant 0 : index
    %44 = vector.load %arg9[%c0_39, %43, %c0_40] : memref<16x24x128xf32, #tpu.memory_space<vmem>>, vector<16x16x128xf32>
    %45 = arith.addf %42, %44 : vector<16x16x128xf32>
    %c0_41 = arith.constant 0 : index
    %c0_42 = arith.constant 0 : index
    %c0_43 = arith.constant 0 : index
    %46 = vector.load %arg8[%c0_41, %c0_42, %c0_43] : memref<16x16x128xf32, #tpu.memory_space<vmem>>, vector<16x16x128xf32>
    tpu.vector_store %arg8[%c0_41, %c0_42, %c0_43], %45 {strides = array<i32>} : memref<16x16x128xf32, #tpu.memory_space<vmem>>, vector<16x16x128xf32>,
    %c2_i32 = arith.constant 2 : i32
    %47 = arith.cmpi eq, %arg2, %c2_i32 : i32
    %48 = arith.extui %47 : i1 to i32
    %c0_i32_44 = arith.constant 0 : i32
    %49 = arith.cmpi ne, %48, %c0_i32_44 : i32
    scf.if %49 {
      %c0_45 = arith.constant 0 : index
      %c0_46 = arith.constant 0 : index
      %c0_47 = arith.constant 0 : index
      %50 = vector.load %arg8[%c0_45, %c0_46, %c0_47] : memref<16x16x128xf32, #tpu.memory_space<vmem>>, vector<16x16x128xf32>
      %cst_48 = arith.constant 0.000000e+00 : f32
      %51 = vector.broadcast %cst_48 : f32 to vector<16x16x128xf32>
      %52 = arith.maximumf %50, %51 : vector<16x16x128xf32>
      %53 = arith.truncf %52 : vector<16x16x128xf32> to vector<16x16x128xbf16>
      %c0_49 = arith.constant 0 : index
      %c0_50 = arith.constant 0 : index
      %c0_51 = arith.constant 0 : index
      %c0_52 = arith.constant 0 : index
      %54 = vector.load %arg7[%c0_49, %c0_50, %c0_51, %c0_52] : memref<1x16x16x128xbf16, #tpu.memory_space<vmem>>, vector<1x16x16x128xbf16>
      %55 = vector.shape_cast %54 : vector<1x16x16x128xbf16> to vector<16x16x128xbf16>
      %56 = vector.shape_cast %53 : vector<16x16x128xbf16> to vector<1x16x16x128xbf16>
      tpu.vector_store %arg7[%c0_49, %c0_50, %c0_51, %c0_52], %56 {strides = array<i32>} : memref<1x16x16x128xbf16, #tpu.memory_space<vmem>>, vector<1x16x16x128xbf16>,
    } else {
    }
    return
  }
  func.func @transform_0(%arg0: i32, %arg1: i32, %arg2: i32, %arg3: memref<3x4xi32, #tpu.memory_space<smem>>) -> (i32, i32, i32, i32) {
    %c0_i32 = arith.constant 0 : i32
    %c0_i32_0 = arith.constant 0 : i32
    %c0_i32_1 = arith.constant 0 : i32
    %c0_i32_2 = arith.constant 0 : i32
    return %arg0, %c0_i32, %c0_i32_0, %c0_i32_1 : i32, i32, i32, i32
  }
  func.func @transform_1(%arg0: i32, %arg1: i32, %arg2: i32, %arg3: memref<3x4xi32, #tpu.memory_space<smem>>) -> (i32, i32, i32) {
    %c0_i32 = arith.constant 0 : i32
    %c0_i32_0 = arith.constant 0 : i32
    return %arg2, %c0_i32, %arg1 : i32, i32, i32
  }
  func.func @transform_2(%arg0: i32, %arg1: i32, %arg2: i32, %arg3: memref<3x4xi32, #tpu.memory_space<smem>>) -> (i32, i32) {
    %c0_i32 = arith.constant 0 : i32
    %c0_i32_0 = arith.constant 0 : i32
    return %c0_i32, %arg1 : i32, i32
  }
  func.func @transform_3(%arg0: i32, %arg1: i32, %arg2: i32, %arg3: memref<3x4xi32, #tpu.memory_space<smem>>) -> (i32, i32, i32, i32) {
    %c0_i32 = arith.constant 0 : i32
    %c0_i32_0 = arith.constant 0 : i32
    %c0_i32_1 = arith.constant 0 : i32
    return %arg0, %c0_i32, %c0_i32_0, %arg1 : i32, i32, i32, i32
  }
}

</mosaic_0001>

<llo_original>
// kernel: tpu_custom_call.1
$region0: #{tpu_custom_call.1}
  #allocation0 [shape = 'u32[]', space=smem, size = 0x4, offset = 0x4, fixed_abs, tag = 'smem constant byte address 0x4 - core index']
  #allocation1 [shape = 'u32[144,128]{1,0:T(1,128)}', space=vmem, size = 0x12000, scoped, tag = 'internal scratch']
  #allocation2 [shape = 'f32[16,16,128]{2,1,0:T(8,128)}', space=vmem, size = 0x20000, scoped, tag = 'scratch operand']
  #allocation3 [shape = 'f32[16,24,128]{2,1,0:T(8,128)}', space=vmem, size = 0x30000, scoped, tag = 'scratch operand']
  #allocation4 [shape = 's32[1]{0}', space=sflag, size = 0x4, scoped, tag = 'scoped memory for tpu_custom_call.1']
  #allocation5 [shape = 'u8[2048]{0}', space=smem, size = 0x800, scoped, tag = 'prefetched SMEM operand 0']
  %s0 = inlined_call_operand.hbm [shape: s32[3,4], index: 0, kind: input, shape index: {}]
  %s1 = inlined_call_operand.hbm [shape: bf16[2,18,24,128], index: 1, kind: input, shape index: {}]
  %s2 = inlined_call_operand.hbm [shape: bf16[9,128,128], index: 2, kind: input, shape index: {}]
  %s3 = inlined_call_operand.vmem [shape: f32[1,128], index: 3, kind: input, shape index: {}]
  %s4 = inlined_call_operand.hbm [shape: bf16[2,16,16,128], index: 4, kind: output, shape index: {}]
  %s5 = sld [smem:[#allocation0]]
  $region61: #{tpu_custom_call.1} parent=0
    _
  %s7 = ssub.s32 1, %s5
  %s8 = scalar_select 0, %s7, %s5
  %10 = dma.hbm_to_smem %s0, 64, [#allocation5], [#allocation4]
  %11 = dma.done [#allocation4], 64
  %12 = sfence
  $region1: #{tpu_custom_call.1} parent=0
    #allocation6 [shape = 'u8[221184]{0}', space=vmem, size = 0x36000, scoped, tag = 'input window, operand 1']
    #allocation7 [shape = 's32[2]{0}', space=sflag, size = 0x8, scoped, tag = 'scoped memory for tpu_custom_call.1']
    #allocation8 [shape = 's32[2]{0}', space=sflag, size = 0x8, scoped, tag = 'scoped memory for tpu_custom_call.1']
    #allocation9 [shape = 'u8[196608]{0}', space=vmem, size = 0x30000, scoped, tag = 'input window, operand 2']
    #allocation10 [shape = 's32[2]{0}', space=sflag, size = 0x8, scoped, tag = 'scoped memory for tpu_custom_call.1']
    #allocation11 [shape = 'u8[131072]{0}', space=vmem, size = 0x20000, scoped, tag = 'output window, operand 0']
    %13 = vsyncpa [#allocation7], 0
    %s14 = scalar_lea.sflag [#allocation7], 1
    %15 = vsyncpa %s14, 0
    %16 = vsyncpa [#allocation10], 0
    %s17 = scalar_lea.sflag [#allocation10], 1
    %18 = vsyncpa %s17, 0
    %19 = vsyncpa [#allocation8], 0
    %s20 = scalar_lea.sflag [#allocation8], 1
    %21 = vsyncpa %s20, 0
    loop: start=0, step=1, limit=8
    $region2: #{tpu_custom_call.1} parent=1 // loop_pre_header
      _
    $region3: #{tpu_custom_call.1} parent=1 // loop_header
      %s23 = sphi 0, %s27
      %p24 = scmp.ge.s32.totalorder %s23, 8
      %s30 = sphi 0, %s49
      %s31 = sphi 0, %s45
      %s32 = sphi 0, %s41
      %s33 = sphi 0, %s30
      %s34 = sphi 0, %s31
      %s35 = sphi 0, %s32
      %s36 = sphi 0, %s33
      %s37 = sphi 0, %s34
      %s38 = sphi 0, %s35
      %s52 = sphi 0, %s54
      %s55 = sphi 0, %s52
      %s56 = sphi 0, %s55
      %s72 = sphi 0, %s56
      %s80 = sphi 0, %s82
      %s83 = sphi 0, %s80
      %s84 = sphi 0, %s83
      %s100 = sphi 0, %s84
      %s106 = sphi 0, %s108
      %s109 = sphi 0, %s106
      %s110 = sphi 0, %s109
      %s126 = sphi 0, %s110
      %s134 = sphi 0, %s136
      %s137 = sphi 0, %s134
      %s138 = sphi 0, %s137
      %s154 = sphi 0, %s138
    $region4: #{tpu_custom_call.1} parent=1 // loop_header_branch
      %26 = sbr.rel (%p24) target = $region8
    $region5: #{tpu_custom_call.1} parent=1 // loop_body
      %s28 = ssub.s32 %s23, 1
      %s29 = ssub.s32 %s23, 2
      %s39 = sadd.s32 1, %s32
      %p40 = scmp.ge.s32.totalorder %s39, 3
      %s41 = scalar_select %p40, 0, %s39
      %s42 = sadd.s32 1, %s31
      %s43 = scalar_select %p40, %s42, %s31
      %p44 = scmp.ge.s32.totalorder %s43, 1
      %s45 = scalar_select %p44, 0, %s43
      %s46 = sadd.s32 1, %s30
      %s47 = scalar_select %p44, %s46, %s30
      %p48 = scmp.ge.s32.totalorder %s47, 2
      %s49 = scalar_select %p48, 0, %s47
      %s50 = ssub.s32 %s30, %s49
      %p51 = scmp.eq.s32.totalorder %s50, 0
      %s53 = sadd.s32 %s52, 1
      %s54 = scalar_select %p51, %s52, %s53
      %p57 = pneg %p51
      %p58 = scmp.eq.s32.totalorder %s23, 5
      %p59 = por %p57, %p58
      %p60 = scmp.ne.s32.totalorder %s52, %s55
      %p61 = scmp.eq.s32.totalorder %s23, 0
      %p62 = por %p60, %p61
      %p63 = scmp.ne.s32.totalorder %s52, %s55
      %p64 = scmp.eq.s32.totalorder %s28, 5
      %p65 = por %p63, %p64
      %p66 = scmp.ne.s32.totalorder %s55, %s56
      %p67 = scmp.eq.s32.totalorder %s28, 0
      %p68 = por %p66, %p67
      %p69 = scmp.ne.s32.totalorder %s55, %s56
      %p70 = scmp.eq.s32.totalorder %s29, 5
      %p71 = por %p69, %p70
      %p73 = scmp.ne.s32.totalorder %s56, %s72
      %p74 = scmp.eq.s32.totalorder %s29, 0
      %p75 = por %p73, %p74
      %s76 = ssub.s32 %s32, %s41
      %s77 = ssub.s32 %s31, %s45
      %s78 = sor.u32 %s76, %s77
      %p79 = scmp.eq.s32.totalorder %s78, 0
      %s81 = sadd.s32 %s80, 1
      %s82 = scalar_select %p79, %s80, %s81
      %p85 = pneg %p79
      %p86 = scmp.eq.s32.totalorder %s23, 5
      %p87 = por %p85, %p86
      %p88 = scmp.ne.s32.totalorder %s80, %s83
      %p89 = scmp.eq.s32.totalorder %s23, 0
      %p90 = por %p88, %p89
      %p91 = scmp.ne.s32.totalorder %s80, %s83
      %p92 = scmp.eq.s32.totalorder %s28, 5
      %p93 = por %p91, %p92
      %p94 = scmp.ne.s32.totalorder %s83, %s84
      %p95 = scmp.eq.s32.totalorder %s28, 0
      %p96 = por %p94, %p95
      %p97 = scmp.ne.s32.totalorder %s83, %s84
      %p98 = scmp.eq.s32.totalorder %s29, 5
      %p99 = por %p97, %p98
      %p101 = scmp.ne.s32.totalorder %s84, %s100
      %p102 = scmp.eq.s32.totalorder %s29, 0
      %p103 = por %p101, %p102
      %s104 = ssub.s32 %s31, %s45
      %p105 = scmp.eq.s32.totalorder %s104, 0
      %s107 = sadd.s32 %s106, 1
      %s108 = scalar_select %p105, %s106, %s107
      %p111 = pneg %p105
      %p112 = scmp.eq.s32.totalorder %s23, 5
      %p113 = por %p111, %p112
      %p114 = scmp.ne.s32.totalorder %s106, %s109
      %p115 = scmp.eq.s32.totalorder %s23, 0
      %p116 = por %p114, %p115
      %p117 = scmp.ne.s32.totalorder %s106, %s109
      %p118 = scmp.eq.s32.totalorder %s28, 5
      %p119 = por %p117, %p118
      %p120 = scmp.ne.s32.totalorder %s109, %s110
      %p121 = scmp.eq.s32.totalorder %s28, 0
      %p122 = por %p120, %p121
      %p123 = scmp.ne.s32.totalorder %s109, %s110
      %p124 = scmp.eq.s32.totalorder %s29, 5
      %p125 = por %p123, %p124
      %p127 = scmp.ne.s32.totalorder %s110, %s126
      %p128 = scmp.eq.s32.totalorder %s29, 0
      %p129 = por %p127, %p128
      %s130 = ssub.s32 %s30, %s49
      %s131 = ssub.s32 %s31, %s45
      %s132 = sor.u32 %s130, %s131
      %p133 = scmp.eq.s32.totalorder %s132, 0
      %s135 = sadd.s32 %s134, 1
      %s136 = scalar_select %p133, %s134, %s135
      %p139 = pneg %p133
      %p140 = scmp.eq.s32.totalorder %s23, 5
      %p141 = por %p139, %p140
      %p142 = scmp.ne.s32.totalorder %s134, %s137
      %p143 = scmp.eq.s32.totalorder %s23, 0
      %p144 = por %p142, %p143
      %p145 = scmp.ne.s32.totalorder %s134, %s137
      %p146 = scmp.eq.s32.totalorder %s28, 5
      %p147 = por %p145, %p146
      %p148 = scmp.ne.s32.totalorder %s137, %s138
      %p149 = scmp.eq.s32.totalorder %s28, 0
      %p150 = por %p148, %p149
      %p151 = scmp.ne.s32.totalorder %s137, %s138
      %p152 = scmp.eq.s32.totalorder %s29, 5
      %p153 = por %p151, %p152
      %p155 = scmp.ne.s32.totalorder %s138, %s154
      %p156 = scmp.eq.s32.totalorder %s29, 0
      %p157 = por %p155, %p156
      %p158 = scmp.le.s32.totalorder 1, %s23
      %p159 = scmp.lt.s32.totalorder %s23, 7
      %p160 = pnand %p158, %p159
      %p161 = pneg %p160
      // Predicated region
      $region9: #{tpu_custom_call.1} parent=5 // pred_check
        _
      $region10: #{tpu_custom_call.1} parent=5 // pred_check_branch
        %163 = sbr.rel (%p160) target = $region12
      $region11: #{tpu_custom_call.1} parent=5 // pred_region
        %s164 = ssub.s32 %s23, 1
        // Predicated region
        $region13: #{tpu_custom_call.1} parent=11 // pred_check
          %p165 = pneg %p122
        $region14: #{tpu_custom_call.1} parent=11 // pred_check_branch
          %167 = sbr.rel (%p165) target = $region16
        $region15: #{tpu_custom_call.1} parent=11 // pred_region
          %p168 = scmp.lt.s32.totalorder %s34, 0
          %s169 = scalar_select %p168, %s34, 0
          %s170 = scalar_lea.vmem %s3, %s169
        $region16: #{tpu_custom_call.1} parent=11 // pred_fallthru
          _
      $region12: #{tpu_custom_call.1} parent=5 // pred_fallthru
        _
      %p171 = scmp.lt.s32.totalorder %s23, 6
      // Predicated region
      $region17: #{tpu_custom_call.1} parent=5 // pred_check
        %p172 = pneg %p171
      $region18: #{tpu_custom_call.1} parent=5 // pred_check_branch
        %174 = sbr.rel (%p172) target = $region20
      $region19: #{tpu_custom_call.1} parent=5 // pred_region
        // Predicated region
        $region21: #{tpu_custom_call.1} parent=19 // pred_check
          %p175 = pneg %p62
        $region22: #{tpu_custom_call.1} parent=19 // pred_check_branch
          %177 = sbr.rel (%p175) target = $region24
        $region23: #{tpu_custom_call.1} parent=19 // pred_region
          %s178 = sand.u32 %s52, 1
          %s179 = scalar_lea.sflag [#allocation7], %s178
          %s180 = sand.u32 %s52, 1
          %s181 = smul.addr %s180, 216
          %s182 = scalar_lea.vmem [#allocation6], %s181
          %s184 = ssub.s32 3456, 3456
          %185 = vsyncadd %s179, %s184
          %s186 = smul.addr %s30, 54
          %s187 = smul.addr %s186, 64
          %s188 = scalar_lea.hbm %s1, %s187
          %s189 = sshll.u32 %s182, 4
          %s190 = int_to_ptr.vmem [resolvable:$true] %s189
          %195 = dma.hbm_to_vmem [thread:$0]  %s188, 3456, %s190, %s179, 64, 64, 4
        $region24: #{tpu_custom_call.1} parent=19 // pred_fallthru
          _
        // Predicated region
        $region25: #{tpu_custom_call.1} parent=19 // pred_check
          %p196 = pneg %p90
        $region26: #{tpu_custom_call.1} parent=19 // pred_check_branch
          %198 = sbr.rel (%p196) target = $region28
        $region27: #{tpu_custom_call.1} parent=19 // pred_region
          %s199 = sand.u32 %s80, 1
          %s200 = scalar_lea.sflag [#allocation10], %s199
          %s201 = sand.u32 %s80, 1
          %s202 = smul.addr %s201, 192
          %s203 = scalar_lea.vmem [#allocation9], %s202
          %s204 = smul.u32 3, %s32
          %s206 = ssub.s32 3072, 3072
          %207 = vsyncadd %s200, %s206
          %s208 = smul.addr %s204, 16
          %s209 = sadd.s32 %s31, %s208
          %s210 = smul.addr %s209, 64
          %s211 = scalar_lea.hbm %s2, %s210
          %s212 = sshll.u32 %s203, 4
          %s213 = int_to_ptr.vmem [resolvable:$true] %s212
          %218 = dma.hbm_to_vmem [thread:$0]  %s211, 3072, %s213, %s200, 64, 64, 4
        $region28: #{tpu_custom_call.1} parent=19 // pred_fallthru
          _
      $region20: #{tpu_custom_call.1} parent=5 // pred_fallthru
        _
      %p219 = scmp.le.s32.totalorder 1, %s23
      %p220 = scmp.lt.s32.totalorder %s23, 7
      %p221 = pnand %p219, %p220
      %p222 = pneg %p221
      // Predicated region
      $region29: #{tpu_custom_call.1} parent=5 // pred_check
        _
      $region30: #{tpu_custom_call.1} parent=5 // pred_check_branch
        %224 = sbr.rel (%p221) target = $region32
      $region31: #{tpu_custom_call.1} parent=5 // pred_region
        %s225 = ssub.s32 %s23, 1
        %s226 = sand.u32 %s55, 1
        %s227 = scalar_lea.sflag [#allocation7], %s226
        %s228 = sand.u32 %s55, 1
        %s229 = smul.addr %s228, 216
        %s230 = scalar_lea.vmem [#allocation6], %s229
        // Predicated region
        $region33: #{tpu_custom_call.1} parent=31 // pred_check
          %p231 = pneg %p68
        $region34: #{tpu_custom_call.1} parent=31 // pred_check_branch
          %233 = sbr.rel (%p231) target = $region36
        $region35: #{tpu_custom_call.1} parent=31 // pred_region
          %234 = dma.done %s227, 3456
        $region36: #{tpu_custom_call.1} parent=31 // pred_fallthru
          _
        %s235 = sand.u32 %s83, 1
        %s236 = scalar_lea.sflag [#allocation10], %s235
        %s237 = sand.u32 %s83, 1
        %s238 = smul.addr %s237, 192
        %s239 = scalar_lea.vmem [#allocation9], %s238
        // Predicated region
        $region37: #{tpu_custom_call.1} parent=31 // pred_check
          %p240 = pneg %p96
        $region38: #{tpu_custom_call.1} parent=31 // pred_check_branch
          %242 = sbr.rel (%p240) target = $region40
        $region39: #{tpu_custom_call.1} parent=31 // pred_region
          %243 = dma.done %s236, 3072
        $region40: #{tpu_custom_call.1} parent=31 // pred_fallthru
          _
        %s244 = sand.u32 %s55, 1
        %s245 = scalar_lea.sflag [#allocation7], %s244
        %s246 = sand.u32 %s55, 1
        %s247 = smul.addr %s246, 216
        %s248 = scalar_lea.vmem [#allocation6], %s247
        %p249 = pneg %p68
        %p250 = pneg %p65
        %s251 = sand.u32 %s83, 1
        %s252 = scalar_lea.sflag [#allocation10], %s251
        %s253 = sand.u32 %s83, 1
        %s254 = smul.addr %s253, 192
        %s255 = scalar_lea.vmem [#allocation9], %s254
        %p256 = pneg %p96
        %p257 = pneg %p93
        %p258 = scmp.lt.s32.totalorder %s34, 0
        %s259 = scalar_select %p258, %s34, 0
        %s260 = scalar_lea.vmem %s3, %s259
        %p261 = pneg %p122
        %p262 = pneg %p119
        %p263 = pneg %p150
        %p264 = pneg %p147
        %s265 = sand.u32 %s137, 1
        %s266 = scalar_lea.sflag [#allocation8], %s265
        %s267 = sand.u32 %s137, 1
        %s268 = smul.addr %s267, 128
        %s269 = scalar_lea.vmem [#allocation11], %s268
        %s270 = smul.u32 3, %s35
        %p271 = scmp.lt.s32.totalorder %s34, 0
        %s272 = scalar_select %p271, %s34, 0
        %s273 = scalar_lea.vmem %s3, %s272
        %p275 = scmp.eq.s32.totalorder %s35, 0
        // Predicated region
        $region41: #{tpu_custom_call.1} parent=31 // pred_check
          %p276 = pneg %p275
        $region42: #{tpu_custom_call.1} parent=31 // pred_check_branch
          %278 = sbr.rel (%p276) target = $region44
        $region43: #{tpu_custom_call.1} parent=31 // pred_region
          %v279 = vld [vmem:[%s273] sm:$0x1]
          %v281 = vlaneseq
          %v282 = vshrl.u32 %v281, 7
          %v283 = vsub.s32 0, %v282
          %v284 = vrot.slane %v279, %v283
          %286 = vst [vmem:[#allocation2] sm:$0xff] %v284
          %287 = vst [vmem:[#allocation2 + $0x8] sm:$0xff] %v284
          %288 = vst [vmem:[#allocation2 + $0x10] sm:$0xff] %v284
          %289 = vst [vmem:[#allocation2 + $0x18] sm:$0xff] %v284
          %290 = vst [vmem:[#allocation2 + $0x20] sm:$0xff] %v284
          %291 = vst [vmem:[#allocation2 + $0x28] sm:$0xff] %v284
          %292 = vst [vmem:[#allocation2 + $0x30] sm:$0xff] %v284
          %293 = vst [vmem:[#allocation2 + $0x38] sm:$0xff] %v284
          %294 = vst [vmem:[#allocation2 + $0x40] sm:$0xff] %v284
          %295 = vst [vmem:[#allocation2 + $0x48] sm:$0xff] %v284
          %296 = vst [vmem:[#allocation2 + $0x50] sm:$0xff] %v284
          %297 = vst [vmem:[#allocation2 + $0x58] sm:$0xff] %v284
          %298 = vst [vmem:[#allocation2 + $0x60] sm:$0xff] %v284
          %299 = vst [vmem:[#allocation2 + $0x68] sm:$0xff] %v284
          %300 = vst [vmem:[#allocation2 + $0x70] sm:$0xff] %v284
          %301 = vst [vmem:[#allocation2 + $0x78] sm:$0xff] %v284
          %302 = vst [vmem:[#allocation2 + $0x80] sm:$0xff] %v284
          %303 = vst [vmem:[#allocation2 + $0x88] sm:$0xff] %v284
          %304 = vst [vmem:[#allocation2 + $0x90] sm:$0xff] %v284
          %305 = vst [vmem:[#allocation2 + $0x98] sm:$0xff] %v284
          %306 = vst [vmem:[#allocation2 + $0xa0] sm:$0xff] %v284
          %307 = vst [vmem:[#allocation2 + $0xa8] sm:$0xff] %v284
          %308 = vst [vmem:[#allocation2 + $0xb0] sm:$0xff] %v284
          %309 = vst [vmem:[#allocation2 + $0xb8] sm:$0xff] %v284
          %310 = vst [vmem:[#allocation2 + $0xc0] sm:$0xff] %v284
          %311 = vst [vmem:[#allocation2 + $0xc8] sm:$0xff] %v284
          %312 = vst [vmem:[#allocation2 + $0xd0] sm:$0xff] %v284
          %313 = vst [vmem:[#allocation2 + $0xd8] sm:$0xff] %v284
          %314 = vst [vmem:[#allocation2 + $0xe0] sm:$0xff] %v284
          %315 = vst [vmem:[#allocation2 + $0xe8] sm:$0xff] %v284
          %316 = vst [vmem:[#allocation2 + $0xf0] sm:$0xff] %v284
          %317 = vst [vmem:[#allocation2 + $0xf8] sm:$0xff] %v284
        $region44: #{tpu_custom_call.1} parent=31 // pred_fallthru
          _
        %s318 = smul.u32 %s35, 128
        %s319 = sld [smem:[#allocation5 + %s318]]
        %s320 = smul.u32 %s319, 3
        %s321 = smul.addr %s320, 4
        %s322 = scalar_lea.vmem %s230, %s321 [#allocation6]
        %v323 = vld [vmem:[%s322] sm:$0xf]
        %v324 = vld [vmem:[%s322 + $0x4] sm:$0xf]
        %v325 = vld [vmem:[%s322 + $0x8] sm:$0xf]
        %v326 = vld [vmem:[%s322 + $0xc] sm:$0xf]
        %v327 = vld [vmem:[%s322 + $0x10] sm:$0xf]
        %v328 = vld [vmem:[%s322 + $0x14] sm:$0xf]
        %v329 = vld [vmem:[%s322 + $0x18] sm:$0xf]
        %v330 = vld [vmem:[%s322 + $0x1c] sm:$0xf]
        %v331 = vld [vmem:[%s322 + $0x20] sm:$0xf]
        %v332 = vld [vmem:[%s322 + $0x24] sm:$0xf]
        %v333 = vld [vmem:[%s322 + $0x28] sm:$0xf]
        %v334 = vld [vmem:[%s322 + $0x2c] sm:$0xf]
        %v335 = vld [vmem:[%s322 + $0x30] sm:$0xf]
        %v336 = vld [vmem:[%s322 + $0x34] sm:$0xf]
        %v337 = vld [vmem:[%s322 + $0x38] sm:$0xf]
        %v338 = vld [vmem:[%s322 + $0x3c] sm:$0xf]
        %v339 = vld [vmem:[%s322 + $0x40] sm:$0xf]
        %v340 = vld [vmem:[%s322 + $0x44] sm:$0xf]
        %v341 = vld [vmem:[%s322 + $0x48] sm:$0xf]
        %v342 = vld [vmem:[%s322 + $0x4c] sm:$0xf]
        %v343 = vld [vmem:[%s322 + $0x50] sm:$0xf]
        %v344 = vld [vmem:[%s322 + $0x54] sm:$0xf]
        %v345 = vld [vmem:[%s322 + $0x58] sm:$0xf]
        %v346 = vld [vmem:[%s322 + $0x5c] sm:$0xf]
        %v347 = vld [vmem:[%s322 + $0x60] sm:$0xf]
        %v348 = vld [vmem:[%s322 + $0x64] sm:$0xf]
        %v349 = vld [vmem:[%s322 + $0x68] sm:$0xf]
        %v350 = vld [vmem:[%s322 + $0x6c] sm:$0xf]
        %v351 = vld [vmem:[%s322 + $0x70] sm:$0xf]
        %v352 = vld [vmem:[%s322 + $0x74] sm:$0xf]
        %v353 = vld [vmem:[%s322 + $0x78] sm:$0xf]
        %v354 = vld [vmem:[%s322 + $0x7c] sm:$0xf]
        %v355 = vld [vmem:[%s322 + $0x80] sm:$0xf]
        %v356 = vld [vmem:[%s322 + $0x84] sm:$0xf]
        %v357 = vld [vmem:[%s322 + $0x88] sm:$0xf]
        %v358 = vld [vmem:[%s322 + $0x8c] sm:$0xf]
        %v359 = vld [vmem:[%s322 + $0x90] sm:$0xf]
        %v360 = vld [vmem:[%s322 + $0x94] sm:$0xf]
        %v361 = vld [vmem:[%s322 + $0x98] sm:$0xf]
        %v362 = vld [vmem:[%s322 + $0x9c] sm:$0xf]
        %v363 = vld [vmem:[%s322 + $0xa0] sm:$0xf]
        %v364 = vld [vmem:[%s322 + $0xa4] sm:$0xf]
        %v365 = vld [vmem:[%s322 + $0xa8] sm:$0xf]
        %v366 = vld [vmem:[%s322 + $0xac] sm:$0xf]
        %v367 = vld [vmem:[%s322 + $0xb0] sm:$0xf]
        %v368 = vld [vmem:[%s322 + $0xb4] sm:$0xf]
        %v369 = vld [vmem:[%s322 + $0xb8] sm:$0xf]
        %v370 = vld [vmem:[%s322 + $0xbc] sm:$0xf]
        %v371 = vld [vmem:[%s239] sm:$0xf]
        %v372 = vld [vmem:[%s239 + $0x4] sm:$0xf]
        %v373 = vld [vmem:[%s239 + $0x8] sm:$0xf]
        %v374 = vld [vmem:[%s239 + $0xc] sm:$0xf]
        %v375 = vld [vmem:[%s239 + $0x10] sm:$0xf]
        %v376 = vld [vmem:[%s239 + $0x14] sm:$0xf]
        %v377 = vld [vmem:[%s239 + $0x18] sm:$0xf]
        %v378 = vld [vmem:[%s239 + $0x1c] sm:$0xf]
        %v379 = vld [vmem:[%s239 + $0x20] sm:$0xf]
        %v380 = vld [vmem:[%s239 + $0x24] sm:$0xf]
        %v381 = vld [vmem:[%s239 + $0x28] sm:$0xf]
        %v382 = vld [vmem:[%s239 + $0x2c] sm:$0xf]
        %v383 = vld [vmem:[%s239 + $0x30] sm:$0xf]
        %v384 = vld [vmem:[%s239 + $0x34] sm:$0xf]
        %v385 = vld [vmem:[%s239 + $0x38] sm:$0xf]
        %v386 = vld [vmem:[%s239 + $0x3c] sm:$0xf]
        %v435 = vunpack.c.l.b16 %v323
        %v436 = vunpack.c.l.b16 %v324
        %v437 = vunpack.c.l.b16 %v325
        %v438 = vunpack.c.l.b16 %v326
        %v439 = vunpack.c.l.b16 %v327
        %v440 = vunpack.c.l.b16 %v328
        %v441 = vunpack.c.l.b16 %v329
        %v442 = vunpack.c.l.b16 %v330
        %v443 = vunpack.c.l.b16 %v331
        %v444 = vunpack.c.l.b16 %v332
        %v445 = vunpack.c.l.b16 %v333
        %v446 = vunpack.c.l.b16 %v334
        %v447 = vunpack.c.l.b16 %v335
        %v448 = vunpack.c.l.b16 %v336
        %v449 = vunpack.c.l.b16 %v337
        %v450 = vunpack.c.l.b16 %v338
        %v451 = vunpack.c.l.b16 %v339
        %v452 = vunpack.c.l.b16 %v340
        %v453 = vunpack.c.l.b16 %v341
        %v454 = vunpack.c.l.b16 %v342
        %v455 = vunpack.c.l.b16 %v343
        %v456 = vunpack.c.l.b16 %v344
        %v457 = vunpack.c.l.b16 %v345
        %v458 = vunpack.c.l.b16 %v346
        %v459 = vunpack.c.l.b16 %v347
        %v460 = vunpack.c.l.b16 %v348
        %v461 = vunpack.c.l.b16 %v349
        %v462 = vunpack.c.l.b16 %v350
        %v463 = vunpack.c.l.b16 %v351
        %v464 = vunpack.c.l.b16 %v352
        %v465 = vunpack.c.l.b16 %v353
        %v466 = vunpack.c.l.b16 %v354
        %v467 = vunpack.c.l.b16 %v355
        %v468 = vunpack.c.l.b16 %v356
        %v469 = vunpack.c.l.b16 %v357
        %v470 = vunpack.c.l.b16 %v358
        %v471 = vunpack.c.l.b16 %v359
        %v472 = vunpack.c.l.b16 %v360
        %v473 = vunpack.c.l.b16 %v361
        %v474 = vunpack.c.l.b16 %v362
        %v475 = vunpack.c.l.b16 %v363
        %v476 = vunpack.c.l.b16 %v364
        %v477 = vunpack.c.l.b16 %v365
        %v478 = vunpack.c.l.b16 %v366
        %v479 = vunpack.c.l.b16 %v367
        %v480 = vunpack.c.l.b16 %v368
        %v481 = vunpack.c.l.b16 %v369
        %v482 = vunpack.c.l.b16 %v370
        %v483 = vpack.c.b16 %v436, %v435
        %v484 = vpack.c.b16 %v438, %v437
        %v485 = vpack.c.b16 %v440, %v439
        %v486 = vpack.c.b16 %v442, %v441
        %v487 = vpack.c.b16 %v444, %v443
        %v488 = vpack.c.b16 %v446, %v445
        %v489 = vpack.c.b16 %v448, %v447
        %v490 = vpack.c.b16 %v450, %v449
        %v491 = vpack.c.b16 %v452, %v451
        %v492 = vpack.c.b16 %v454, %v453
        %v493 = vpack.c.b16 %v456, %v455
        %v494 = vpack.c.b16 %v458, %v457
        %v495 = vpack.c.b16 %v460, %v459
        %v496 = vpack.c.b16 %v462, %v461
        %v497 = vpack.c.b16 %v464, %v463
        %v498 = vpack.c.b16 %v466, %v465
        %v499 = vpack.c.b16 %v468, %v467
        %v500 = vpack.c.b16 %v470, %v469
        %v501 = vpack.c.b16 %v472, %v471
        %v502 = vpack.c.b16 %v474, %v473
        %v503 = vpack.c.b16 %v476, %v475
        %v504 = vpack.c.b16 %v478, %v477
        %v505 = vpack.c.b16 %v480, %v479
        %v506 = vpack.c.b16 %v482, %v481
        %v547 = vunpack.c.l.b16 %v371
        %v548 = vunpack.c.l.b16 %v372
        %v549 = vunpack.c.l.b16 %v373
        %v550 = vunpack.c.l.b16 %v374
        %v551 = vunpack.c.l.b16 %v375
        %v552 = vunpack.c.l.b16 %v376
        %v553 = vunpack.c.l.b16 %v377
        %v554 = vunpack.c.l.b16 %v378
        %v555 = vunpack.c.l.b16 %v379
        %v556 = vunpack.c.l.b16 %v380
        %v557 = vunpack.c.l.b16 %v381
        %v558 = vunpack.c.l.b16 %v382
        %v559 = vunpack.c.l.b16 %v383
        %v560 = vunpack.c.l.b16 %v384
        %v561 = vunpack.c.l.b16 %v385
        %v562 = vunpack.c.l.b16 %v386
        %v563 = vpack.c.b16 %v548, %v547
        %v564 = vpack.c.b16 %v550, %v549
        %v565 = vpack.c.b16 %v552, %v551
        %v566 = vpack.c.b16 %v554, %v553
        %v567 = vpack.c.b16 %v556, %v555
        %v568 = vpack.c.b16 %v558, %v557
        %v569 = vpack.c.b16 %v560, %v559
        %v570 = vpack.c.b16 %v562, %v561
        %579 = vmatprep.subr.bf16.mxu0 0
        %580 = vmatpush1.bf16.msra.mxu0 %v563
        %581 = vmatprep.subr.bf16.mxu0 0
        %582 = vmatpush1.bf16.msra.mxu0 %v564
        %583 = vmatprep.subr.bf16.mxu0 0
        %584 = vmatpush1.bf16.msra.mxu0 %v565
        %585 = vmatprep.subr.bf16.mxu0 0
        %586 = vmatpush1.bf16.msra.mxu0 %v566
        %587 = vmatprep.subr.bf16.mxu0 0
        %588 = vmatpush1.bf16.msra.mxu0 %v567
        %589 = vmatprep.subr.bf16.mxu0 0
        %590 = vmatpush1.bf16.msra.mxu0 %v568
        %591 = vmatprep.subr.bf16.mxu0 0
        %592 = vmatpush1.bf16.msra.mxu0 %v569
        %593 = vmatprep.subr.bf16.mxu0 0
        %594 = vmatpush1.bf16.msra.mxu0 %v570
        %595 = vmatprep.subr.bf16.mxu0 0
        %596 = vmatpush1.bf16.msra.mxu0 0
        %597 = vmatprep.subr.bf16.mxu0 0
        %598 = vmatpush1.bf16.msra.mxu0 0
        %599 = vmatprep.subr.bf16.mxu0 0
        %600 = vmatpush1.bf16.msra.mxu0 0
        %601 = vmatprep.subr.bf16.mxu0 0
        %602 = vmatpush1.bf16.msra.mxu0 0
        %603 = vmatprep.subr.bf16.mxu0 0
        %604 = vmatpush1.bf16.msra.mxu0 0
        %605 = vmatprep.subr.bf16.mxu0 0
        %606 = vmatpush1.bf16.msra.mxu0 0
        %607 = vmatprep.subr.bf16.mxu0 0
        %608 = vmatpush1.bf16.msra.mxu0 0
        %609 = vmatprep.subr.bf16.mxu0 0
        %610 = vmatpush1.bf16.msra.mxu0 0
        %611 = vmatprep.mubr.bf16.mxu0 0
        %612 = vmatmul.mubr.bf16.gmra.mrb[0].mxu0 %v483
        %v613 = vpop.f32.mrb[0].mxu0
        %v614 = vadd.f32 0.0, %v613
        %v615 = vpop.f32.mrb[0].mxu0
        %v616 = vpop.f32.mrb[0].mxu0
        %v617 = vadd.f32 0.0, %v616
        %v618 = vpop.f32.mrb[0].mxu0
        %619 = vmatprep.mubr.bf16.mxu0 0
        %620 = vmatmul.mubr.bf16.gmra.mrb[0].mxu0 %v484
        %v621 = vpop.f32.mrb[0].mxu0
        %v622 = vadd.f32 0.0, %v621
        %v623 = vpop.f32.mrb[0].mxu0
        %v624 = vpop.f32.mrb[0].mxu0
        %v625 = vadd.f32 0.0, %v624
        %v626 = vpop.f32.mrb[0].mxu0
        %627 = vmatprep.mubr.bf16.mxu0 0
        %628 = vmatmul.mubr.bf16.gmra.mrb[0].mxu0 %v485
        %v629 = vpop.f32.mrb[0].mxu0
        %v630 = vadd.f32 0.0, %v629
        %v631 = vpop.f32.mrb[0].mxu0
        %v632 = vpop.f32.mrb[0].mxu0
        %v633 = vadd.f32 0.0, %v632
        %v634 = vpop.f32.mrb[0].mxu0
        %635 = vmatprep.mubr.bf16.mxu0 0
        %636 = vmatmul.mubr.bf16.gmra.mrb[0].mxu0 %v486
        %v637 = vpop.f32.mrb[0].mxu0
        %v638 = vadd.f32 0.0, %v637
        %v639 = vpop.f32.mrb[0].mxu0
        %v640 = vpop.f32.mrb[0].mxu0
        %v641 = vadd.f32 0.0, %v640
        %v642 = vpop.f32.mrb[0].mxu0
        %643 = vmatprep.mubr.bf16.mxu0 0
        %644 = vmatmul.mubr.bf16.gmra.mrb[0].mxu0 %v487
        %v645 = vpop.f32.mrb[0].mxu0
        %v646 = vadd.f32 0.0, %v645
        %v647 = vpop.f32.mrb[0].mxu0
        %v648 = vpop.f32.mrb[0].mxu0
        %v649 = vadd.f32 0.0, %v648
        %v650 = vpop.f32.mrb[0].mxu0
        %651 = vmatprep.mubr.bf16.mxu0 0
        %652 = vmatmul.mubr.bf16.gmra.mrb[0].mxu0 %v488
        %v653 = vpop.f32.mrb[0].mxu0
        %v654 = vadd.f32 0.0, %v653
        %v655 = vpop.f32.mrb[0].mxu0
        %v656 = vpop.f32.mrb[0].mxu0
        %v657 = vadd.f32 0.0, %v656
        %v658 = vpop.f32.mrb[0].mxu0
        %659 = vmatprep.mubr.bf16.mxu0 0
        %660 = vmatmul.mubr.bf16.gmra.mrb[0].mxu0 %v489
        %v661 = vpop.f32.mrb[0].mxu0
        %v662 = vadd.f32 0.0, %v661
        %v663 = vpop.f32.mrb[0].mxu0
        %v664 = vpop.f32.mrb[0].mxu0
        %v665 = vadd.f32 0.0, %v664
        %v666 = vpop.f32.mrb[0].mxu0
        %667 = vmatprep.mubr.bf16.mxu0 0
        %668 = vmatmul.mubr.bf16.gmra.mrb[0].mxu0 %v490
        %v669 = vpop.f32.mrb[0].mxu0
        %v670 = vadd.f32 0.0, %v669
        %v671 = vpop.f32.mrb[0].mxu0
        %v672 = vpop.f32.mrb[0].mxu0
        %v673 = vadd.f32 0.0, %v672
        %v674 = vpop.f32.mrb[0].mxu0
        %675 = vmatprep.mubr.bf16.mxu0 0
        %676 = vmatmul.mubr.bf16.gmra.mrb[0].mxu0 %v491
        %v677 = vpop.f32.mrb[0].mxu0
        %v678 = vadd.f32 0.0, %v677
        %v679 = vpop.f32.mrb[0].mxu0
        %v680 = vpop.f32.mrb[0].mxu0
        %v681 = vadd.f32 0.0, %v680
        %v682 = vpop.f32.mrb[0].mxu0
        %683 = vmatprep.mubr.bf16.mxu0 0
        %684 = vmatmul.mubr.bf16.gmra.mrb[0].mxu0 %v492
        %v685 = vpop.f32.mrb[0].mxu0
        %v686 = vadd.f32 0.0, %v685
        %v687 = vpop.f32.mrb[0].mxu0
        %v688 = vpop.f32.mrb[0].mxu0
        %v689 = vadd.f32 0.0, %v688
        %v690 = vpop.f32.mrb[0].mxu0
        %691 = vmatprep.mubr.bf16.mxu0 0
        %692 = vmatmul.mubr.bf16.gmra.mrb[0].mxu0 %v493
        %v693 = vpop.f32.mrb[0].mxu0
        %v694 = vadd.f32 0.0, %v693
        %v695 = vpop.f32.mrb[0].mxu0
        %v696 = vpop.f32.mrb[0].mxu0
        %v697 = vadd.f32 0.0, %v696
        %v698 = vpop.f32.mrb[0].mxu0
        %699 = vmatprep.mubr.bf16.mxu0 0
        %700 = vmatmul.mubr.bf16.gmra.mrb[0].mxu0 %v494
        %v701 = vpop.f32.mrb[0].mxu0
        %v702 = vadd.f32 0.0, %v701
        %v703 = vpop.f32.mrb[0].mxu0
        %v704 = vpop.f32.mrb[0].mxu0
        %v705 = vadd.f32 0.0, %v704
        %v706 = vpop.f32.mrb[0].mxu0
        %707 = vmatprep.mubr.bf16.mxu0 0
        %708 = vmatmul.mubr.bf16.gmra.mrb[0].mxu0 %v495
        %v709 = vpop.f32.mrb[0].mxu0
        %v710 = vadd.f32 0.0, %v709
        %v711 = vpop.f32.mrb[0].mxu0
        %v712 = vpop.f32.mrb[0].mxu0
        %v713 = vadd.f32 0.0, %v712
        %v714 = vpop.f32.mrb[0].mxu0
        %715 = vmatprep.mubr.bf16.mxu0 0
        %716 = vmatmul.mubr.bf16.gmra.mrb[0].mxu0 %v496
        %v717 = vpop.f32.mrb[0].mxu0
        %v718 = vadd.f32 0.0, %v717
        %v719 = vpop.f32.mrb[0].mxu0
        %v720 = vpop.f32.mrb[0].mxu0
        %v721 = vadd.f32 0.0, %v720
        %v722 = vpop.f32.mrb[0].mxu0
        %723 = vmatprep.mubr.bf16.mxu0 0
        %724 = vmatmul.mubr.bf16.gmra.mrb[0].mxu0 %v497
        %v725 = vpop.f32.mrb[0].mxu0
        %v726 = vadd.f32 0.0, %v725
        %v727 = vpop.f32.mrb[0].mxu0
        %v728 = vpop.f32.mrb[0].mxu0
        %v729 = vadd.f32 0.0, %v728
        %v730 = vpop.f32.mrb[0].mxu0
        %731 = vmatprep.mubr.bf16.mxu0 0
        %732 = vmatmul.mubr.bf16.gmra.mrb[0].mxu0 %v498
        %v733 = vpop.f32.mrb[0].mxu0
        %v734 = vadd.f32 0.0, %v733
        %v735 = vpop.f32.mrb[0].mxu0
        %v736 = vpop.f32.mrb[0].mxu0
        %v737 = vadd.f32 0.0, %v736
        %v738 = vpop.f32.mrb[0].mxu0
        %739 = vmatprep.mubr.bf16.mxu0 0
        %740 = vmatmul.mubr.bf16.gmra.mrb[0].mxu0 %v499
        %v741 = vpop.f32.mrb[0].mxu0
        %v742 = vadd.f32 0.0, %v741
        %v743 = vpop.f32.mrb[0].mxu0
        %v744 = vpop.f32.mrb[0].mxu0
        %v745 = vadd.f32 0.0, %v744
        %v746 = vpop.f32.mrb[0].mxu0
        %747 = vmatprep.mubr.bf16.mxu0 0
        %748 = vmatmul.mubr.bf16.gmra.mrb[0].mxu0 %v500
        %v749 = vpop.f32.mrb[0].mxu0
        %v750 = vadd.f32 0.0, %v749
        %v751 = vpop.f32.mrb[0].mxu0
        %v752 = vpop.f32.mrb[0].mxu0
        %v753 = vadd.f32 0.0, %v752
        %v754 = vpop.f32.mrb[0].mxu0
        %755 = vmatprep.mubr.bf16.mxu0 0
        %756 = vmatmul.mubr.bf16.gmra.mrb[0].mxu0 %v501
        %v757 = vpop.f32.mrb[0].mxu0
        %v758 = vadd.f32 0.0, %v757
        %v759 = vpop.f32.mrb[0].mxu0
        %v760 = vpop.f32.mrb[0].mxu0
        %v761 = vadd.f32 0.0, %v760
        %v762 = vpop.f32.mrb[0].mxu0
        %763 = vmatprep.mubr.bf16.mxu0 0
        %764 = vmatmul.mubr.bf16.gmra.mrb[0].mxu0 %v502
        %v765 = vpop.f32.mrb[0].mxu0
        %v766 = vadd.f32 0.0, %v765
        %v767 = vpop.f32.mrb[0].mxu0
        %v768 = vpop.f32.mrb[0].mxu0
        %v769 = vadd.f32 0.0, %v768
        %v770 = vpop.f32.mrb[0].mxu0
        %771 = vmatprep.mubr.bf16.mxu0 0
        %772 = vmatmul.mubr.bf16.gmra.mrb[0].mxu0 %v503
        %v773 = vpop.f32.mrb[0].mxu0
        %v774 = vadd.f32 0.0, %v773
        %v775 = vpop.f32.mrb[0].mxu0
        %v776 = vpop.f32.mrb[0].mxu0
        %v777 = vadd.f32 0.0, %v776
        %v778 = vpop.f32.mrb[0].mxu0
        %779 = vmatprep.mubr.bf16.mxu0 0
        %780 = vmatmul.mubr.bf16.gmra.mrb[0].mxu0 %v504
        %v781 = vpop.f32.mrb[0].mxu0
        %v782 = vadd.f32 0.0, %v781
        %v783 = vpop.f32.mrb[0].mxu0
        %v784 = vpop.f32.mrb[0].mxu0
        %v785 = vadd.f32 0.0, %v784
        %v786 = vpop.f32.mrb[0].mxu0
        %787 = vmatprep.mubr.bf16.mxu0 0
        %788 = vmatmul.mubr.bf16.gmra.mrb[0].mxu0 %v505
        %v789 = vpop.f32.mrb[0].mxu0
        %v790 = vadd.f32 0.0, %v789
        %v791 = vpop.f32.mrb[0].mxu0
        %v792 = vpop.f32.mrb[0].mxu0
        %v793 = vadd.f32 0.0, %v792
        %v794 = vpop.f32.mrb[0].mxu0
        %795 = vmatprep.mubr.bf16.mxu0 0
        %796 = vmatmul.mubr.bf16.gmra.mrb[0].mxu0 %v506
        %v797 = vpop.f32.mrb[0].mxu0
        %v798 = vadd.f32 0.0, %v797
        %v799 = vpop.f32.mrb[0].mxu0
        %v800 = vpop.f32.mrb[0].mxu0
        %v801 = vadd.f32 0.0, %v800
        %v802 = vpop.f32.mrb[0].mxu0
        %803 = vdwg.mxu0
        %804 = vst [vmem:[#allocation3] sm:$0xff] %v614
        %805 = vst [vmem:[#allocation3 + $0x8] sm:$0xff] %v617
        %806 = vst [vmem:[#allocation3 + $0x10] sm:$0xff] %v622
        %807 = vst [vmem:[#allocation3 + $0x18] sm:$0xff] %v625
        %808 = vst [vmem:[#allocation3 + $0x20] sm:$0xff] %v630
        %809 = vst [vmem:[#allocation3 + $0x28] sm:$0xff] %v633
        %810 = vst [vmem:[#allocation3 + $0x30] sm:$0xff] %v638
        %811 = vst [vmem:[#allocation3 + $0x38] sm:$0xff] %v641
        %812 = vst [vmem:[#allocation3 + $0x40] sm:$0xff] %v646
        %813 = vst [vmem:[#allocation3 + $0x48] sm:$0xff] %v649
        %814 = vst [vmem:[#allocation3 + $0x50] sm:$0xff] %v654
        %815 = vst [vmem:[#allocation3 + $0x58] sm:$0xff] %v657
        %816 = vst [vmem:[#allocation3 + $0x60] sm:$0xff] %v662
        %817 = vst [vmem:[#allocation3 + $0x68] sm:$0xff] %v665
        %818 = vst [vmem:[#allocation3 + $0x70] sm:$0xff] %v670
        %819 = vst [vmem:[#allocation3 + $0x78] sm:$0xff] %v673
        %820 = vst [vmem:[#allocation3 + $0x80] sm:$0xff] %v678
        %821 = vst [vmem:[#allocation3 + $0x88] sm:$0xff] %v681
        %822 = vst [vmem:[#allocation3 + $0x90] sm:$0xff] %v686
        %823 = vst [vmem:[#allocation3 + $0x98] sm:$0xff] %v689
        %824 = vst [vmem:[#allocation3 + $0xa0] sm:$0xff] %v694
        %825 = vst [vmem:[#allocation3 + $0xa8] sm:$0xff] %v697
        %826 = vst [vmem:[#allocation3 + $0xb0] sm:$0xff] %v702
        %827 = vst [vmem:[#allocation3 + $0xb8] sm:$0xff] %v705
        %828 = vst [vmem:[#allocation3 + $0xc0] sm:$0xff] %v710
        %829 = vst [vmem:[#allocation3 + $0xc8] sm:$0xff] %v713
        %830 = vst [vmem:[#allocation3 + $0xd0] sm:$0xff] %v718
        %831 = vst [vmem:[#allocation3 + $0xd8] sm:$0xff] %v721
        %832 = vst [vmem:[#allocation3 + $0xe0] sm:$0xff] %v726
        %833 = vst [vmem:[#allocation3 + $0xe8] sm:$0xff] %v729
        %834 = vst [vmem:[#allocation3 + $0xf0] sm:$0xff] %v734
        %835 = vst [vmem:[#allocation3 + $0xf8] sm:$0xff] %v737
        %836 = vst [vmem:[#allocation3 + $0x100] sm:$0xff] %v742
        %837 = vst [vmem:[#allocation3 + $0x108] sm:$0xff] %v745
        %838 = vst [vmem:[#allocation3 + $0x110] sm:$0xff] %v750
        %839 = vst [vmem:[#allocation3 + $0x118] sm:$0xff] %v753
        %840 = vst [vmem:[#allocation3 + $0x120] sm:$0xff] %v758
        %841 = vst [vmem:[#allocation3 + $0x128] sm:$0xff] %v761
        %842 = vst [vmem:[#allocation3 + $0x130] sm:$0xff] %v766
        %843 = vst [vmem:[#allocation3 + $0x138] sm:$0xff] %v769
        %844 = vst [vmem:[#allocation3 + $0x140] sm:$0xff] %v774
        %845 = vst [vmem:[#allocation3 + $0x148] sm:$0xff] %v777
        %846 = vst [vmem:[#allocation3 + $0x150] sm:$0xff] %v782
        %847 = vst [vmem:[#allocation3 + $0x158] sm:$0xff] %v785
        %848 = vst [vmem:[#allocation3 + $0x160] sm:$0xff] %v790
        %849 = vst [vmem:[#allocation3 + $0x168] sm:$0xff] %v793
        %850 = vst [vmem:[#allocation3 + $0x170] sm:$0xff] %v798
        %851 = vst [vmem:[#allocation3 + $0x178] sm:$0xff] %v801
        %s852 = sadd.s32 %s318, 1
        %s853 = sld [smem:[#allocation5 + %s852]]
        %s854 = smul.u32 %s853, 3
        %s855 = smul.addr %s854, 4
        %s856 = scalar_lea.vmem %s230, %s855 [#allocation6]
        %v857 = vld [vmem:[%s856] sm:$0xf]
        %v858 = vld [vmem:[%s856 + $0x4] sm:$0xf]
        %v859 = vld [vmem:[%s856 + $0x8] sm:$0xf]
        %v860 = vld [vmem:[%s856 + $0xc] sm:$0xf]
        %v861 = vld [vmem:[%s856 + $0x10] sm:$0xf]
        %v862 = vld [vmem:[%s856 + $0x14] sm:$0xf]
        %v863 = vld [vmem:[%s856 + $0x18] sm:$0xf]
        %v864 = vld [vmem:[%s856 + $0x1c] sm:$0xf]
        %v865 = vld [vmem:[%s856 + $0x20] sm:$0xf]
        %v866 = vld [vmem:[%s856 + $0x24] sm:$0xf]
        %v867 = vld [vmem:[%s856 + $0x28] sm:$0xf]
        %v868 = vld [vmem:[%s856 + $0x2c] sm:$0xf]
        %v869 = vld [vmem:[%s856 + $0x30] sm:$0xf]
        %v870 = vld [vmem:[%s856 + $0x34] sm:$0xf]
        %v871 = vld [vmem:[%s856 + $0x38] sm:$0xf]
        %v872 = vld [vmem:[%s856 + $0x3c] sm:$0xf]
        %v873 = vld [vmem:[%s856 + $0x40] sm:$0xf]
        %v874 = vld [vmem:[%s856 + $0x44] sm:$0xf]
        %v875 = vld [vmem:[%s856 + $0x48] sm:$0xf]
        %v876 = vld [vmem:[%s856 + $0x4c] sm:$0xf]
        %v877 = vld [vmem:[%s856 + $0x50] sm:$0xf]
        %v878 = vld [vmem:[%s856 + $0x54] sm:$0xf]
        %v879 = vld [vmem:[%s856 + $0x58] sm:$0xf]
        %v880 = vld [vmem:[%s856 + $0x5c] sm:$0xf]
        %v881 = vld [vmem:[%s856 + $0x60] sm:$0xf]
        %v882 = vld [vmem:[%s856 + $0x64] sm:$0xf]
        %v883 = vld [vmem:[%s856 + $0x68] sm:$0xf]
        %v884 = vld [vmem:[%s856 + $0x6c] sm:$0xf]
        %v885 = vld [vmem:[%s856 + $0x70] sm:$0xf]
        %v886 = vld [vmem:[%s856 + $0x74] sm:$0xf]
        %v887 = vld [vmem:[%s856 + $0x78] sm:$0xf]
        %v888 = vld [vmem:[%s856 + $0x7c] sm:$0xf]
        %v889 = vld [vmem:[%s856 + $0x80] sm:$0xf]
        %v890 = vld [vmem:[%s856 + $0x84] sm:$0xf]
        %v891 = vld [vmem:[%s856 + $0x88] sm:$0xf]
        %v892 = vld [vmem:[%s856 + $0x8c] sm:$0xf]
        %v893 = vld [vmem:[%s856 + $0x90] sm:$0xf]
        %v894 = vld [vmem:[%s856 + $0x94] sm:$0xf]
        %v895 = vld [vmem:[%s856 + $0x98] sm:$0xf]
        %v896 = vld [vmem:[%s856 + $0x9c] sm:$0xf]
        %v897 = vld [vmem:[%s856 + $0xa0] sm:$0xf]
        %v898 = vld [vmem:[%s856 + $0xa4] sm:$0xf]
        %v899 = vld [vmem:[%s856 + $0xa8] sm:$0xf]
        %v900 = vld [vmem:[%s856 + $0xac] sm:$0xf]
        %v901 = vld [vmem:[%s856 + $0xb0] sm:$0xf]
        %v902 = vld [vmem:[%s856 + $0xb4] sm:$0xf]
        %v903 = vld [vmem:[%s856 + $0xb8] sm:$0xf]
        %v904 = vld [vmem:[%s856 + $0xbc] sm:$0xf]
        %s905 = scalar_lea.vmem %s239, 64 [#allocation9]
        %v906 = vld [vmem:[%s905] sm:$0xf]
        %v907 = vld [vmem:[%s905 + $0x4] sm:$0xf]
        %v908 = vld [vmem:[%s905 + $0x8] sm:$0xf]
        %v909 = vld [vmem:[%s905 + $0xc] sm:$0xf]
        %v910 = vld [vmem:[%s905 + $0x10] sm:$0xf]
        %v911 = vld [vmem:[%s905 + $0x14] sm:$0xf]
        %v912 = vld [vmem:[%s905 + $0x18] sm:$0xf]
        %v913 = vld [vmem:[%s905 + $0x1c] sm:$0xf]
        %v914 = vld [vmem:[%s905 + $0x20] sm:$0xf]
        %v915 = vld [vmem:[%s905 + $0x24] sm:$0xf]
        %v916 = vld [vmem:[%s905 + $0x28] sm:$0xf]
        %v917 = vld [vmem:[%s905 + $0x2c] sm:$0xf]
        %v918 = vld [vmem:[%s905 + $0x30] sm:$0xf]
        %v919 = vld [vmem:[%s905 + $0x34] sm:$0xf]
        %v920 = vld [vmem:[%s905 + $0x38] sm:$0xf]
        %v921 = vld [vmem:[%s905 + $0x3c] sm:$0xf]
        %v970 = vunpack.c.l.b16 %v857
        %v971 = vunpack.c.l.b16 %v858
        %v972 = vunpack.c.l.b16 %v859
        %v973 = vunpack.c.l.b16 %v860
        %v974 = vunpack.c.l.b16 %v861
        %v975 = vunpack.c.l.b16 %v862
        %v976 = vunpack.c.l.b16 %v863
        %v977 = vunpack.c.l.b16 %v864
        %v978 = vunpack.c.l.b16 %v865
        %v979 = vunpack.c.l.b16 %v866
        %v980 = vunpack.c.l.b16 %v867
        %v981 = vunpack.c.l.b16 %v868
        %v982 = vunpack.c.l.b16 %v869
        %v983 = vunpack.c.l.b16 %v870
        %v984 = vunpack.c.l.b16 %v871
        %v985 = vunpack.c.l.b16 %v872
        %v986 = vunpack.c.l.b16 %v873
        %v987 = vunpack.c.l.b16 %v874
        %v988 = vunpack.c.l.b16 %v875
        %v989 = vunpack.c.l.b16 %v876
        %v990 = vunpack.c.l.b16 %v877
        %v991 = vunpack.c.l.b16 %v878
        %v992 = vunpack.c.l.b16 %v879
        %v993 = vunpack.c.l.b16 %v880
        %v994 = vunpack.c.l.b16 %v881
        %v995 = vunpack.c.l.b16 %v882
        %v996 = vunpack.c.l.b16 %v883
        %v997 = vunpack.c.l.b16 %v884
        %v998 = vunpack.c.l.b16 %v885
        %v999 = vunpack.c.l.b16 %v886
        %v1000 = vunpack.c.l.b16 %v887
        %v1001 = vunpack.c.l.b16 %v888
        %v1002 = vunpack.c.l.b16 %v889
        %v1003 = vunpack.c.l.b16 %v890
        %v1004 = vunpack.c.l.b16 %v891
        %v1005 = vunpack.c.l.b16 %v892
        %v1006 = vunpack.c.l.b16 %v893
        %v1007 = vunpack.c.l.b16 %v894
        %v1008 = vunpack.c.l.b16 %v895
        %v1009 = vunpack.c.l.b16 %v896
        %v1010 = vunpack.c.l.b16 %v897
        %v1011 = vunpack.c.l.b16 %v898
        %v1012 = vunpack.c.l.b16 %v899
        %v1013 = vunpack.c.l.b16 %v900
        %v1014 = vunpack.c.l.b16 %v901
        %v1015 = vunpack.c.l.b16 %v902
        %v1016 = vunpack.c.l.b16 %v903
        %v1017 = vunpack.c.l.b16 %v904
        %v1018 = vpack.c.b16 %v971, %v970
        %v1019 = vpack.c.b16 %v973, %v972
        %v1020 = vpack.c.b16 %v975, %v974
        %v1021 = vpack.c.b16 %v977, %v976
        %v1022 = vpack.c.b16 %v979, %v978
        %v1023 = vpack.c.b16 %v981, %v980
        %v1024 = vpack.c.b16 %v983, %v982
        %v1025 = vpack.c.b16 %v985, %v984
        %v1026 = vpack.c.b16 %v987, %v986
        %v1027 = vpack.c.b16 %v989, %v988
        %v1028 = vpack.c.b16 %v991, %v990
        %v1029 = vpack.c.b16 %v993, %v992
        %v1030 = vpack.c.b16 %v995, %v994
        %v1031 = vpack.c.b16 %v997, %v996
        %v1032 = vpack.c.b16 %v999, %v998
        %v1033 = vpack.c.b16 %v1001, %v1000
        %v1034 = vpack.c.b16 %v1003, %v1002
        %v1035 = vpack.c.b16 %v1005, %v1004
        %v1036 = vpack.c.b16 %v1007, %v1006
        %v1037 = vpack.c.b16 %v1009, %v1008
        %v1038 = vpack.c.b16 %v1011, %v1010
        %v1039 = vpack.c.b16 %v1013, %v1012
        %v1040 = vpack.c.b16 %v1015, %v1014
        %v1041 = vpack.c.b16 %v1017, %v1016
        %v1082 = vunpack.c.l.b16 %v906
        %v1083 = vunpack.c.l.b16 %v907
        %v1084 = vunpack.c.l.b16 %v908
        %v1085 = vunpack.c.l.b16 %v909
        %v1086 = vunpack.c.l.b16 %v910
        %v1087 = vunpack.c.l.b16 %v911
        %v1088 = vunpack.c.l.b16 %v912
        %v1089 = vunpack.c.l.b16 %v913
        %v1090 = vunpack.c.l.b16 %v914
        %v1091 = vunpack.c.l.b16 %v915
        %v1092 = vunpack.c.l.b16 %v916
        %v1093 = vunpack.c.l.b16 %v917
        %v1094 = vunpack.c.l.b16 %v918
        %v1095 = vunpack.c.l.b16 %v919
        %v1096 = vunpack.c.l.b16 %v920
        %v1097 = vunpack.c.l.b16 %v921
        %v1098 = vpack.c.b16 %v1083, %v1082
        %v1099 = vpack.c.b16 %v1085, %v1084
        %v1100 = vpack.c.b16 %v1087, %v1086
        %v1101 = vpack.c.b16 %v1089, %v1088
        %v1102 = vpack.c.b16 %v1091, %v1090
        %v1103 = vpack.c.b16 %v1093, %v1092
        %v1104 = vpack.c.b16 %v1095, %v1094
        %v1105 = vpack.c.b16 %v1097, %v1096
        %1114 = vmatprep.subr.bf16.mxu0 0
        %1115 = vmatpush1.bf16.msra.mxu0 %v1098
        %1116 = vmatprep.subr.bf16.mxu0 0
        %1117 = vmatpush1.bf16.msra.mxu0 %v1099
        %1118 = vmatprep.subr.bf16.mxu0 0
        %1119 = vmatpush1.bf16.msra.mxu0 %v1100
        %1120 = vmatprep.subr.bf16.mxu0 0
        %1121 = vmatpush1.bf16.msra.mxu0 %v1101
        %1122 = vmatprep.subr.bf16.mxu0 0
        %1123 = vmatpush1.bf16.msra.mxu0 %v1102
        %1124 = vmatprep.subr.bf16.mxu0 0
        %1125 = vmatpush1.bf16.msra.mxu0 %v1103
        %1126 = vmatprep.subr.bf16.mxu0 0
        %1127 = vmatpush1.bf16.msra.mxu0 %v1104
        %1128 = vmatprep.subr.bf16.mxu0 0
        %1129 = vmatpush1.bf16.msra.mxu0 %v1105
        %1130 = vmatprep.subr.bf16.mxu0 0
        %1131 = vmatpush1.bf16.msra.mxu0 0
        %1132 = vmatprep.subr.bf16.mxu0 0
        %1133 = vmatpush1.bf16.msra.mxu0 0
        %1134 = vmatprep.subr.bf16.mxu0 0
        %1135 = vmatpush1.bf16.msra.mxu0 0
        %1136 = vmatprep.subr.bf16.mxu0 0
        %1137 = vmatpush1.bf16.msra.mxu0 0
        %1138 = vmatprep.subr.bf16.mxu0 0
        %1139 = vmatpush1.bf16.msra.mxu0 0
        %1140 = vmatprep.subr.bf16.mxu0 0
        %1141 = vmatpush1.bf16.msra.mxu0 0
        %1142 = vmatprep.subr.bf16.mxu0 0
        %1143 = vmatpush1.bf16.msra.mxu0 0
        %1144 = vmatprep.subr.bf16.mxu0 0
        %1145 = vmatpush1.bf16.msra.mxu0 0
        %1146 = vmatprep.mubr.bf16.mxu0 0
        %1147 = vmatmul.mubr.bf16.gmra.mrb[0].mxu0 %v1018
        %v1148 = vpop.f32.mrb[0].mxu0
        %v1149 = vadd.f32 0.0, %v1148
        %v1150 = vpop.f32.mrb[0].mxu0
        %v1151 = vpop.f32.mrb[0].mxu0
        %v1152 = vadd.f32 0.0, %v1151
        %v1153 = vpop.f32.mrb[0].mxu0
        %1154 = vmatprep.mubr.bf16.mxu0 0
        %1155 = vmatmul.mubr.bf16.gmra.mrb[0].mxu0 %v1019
        %v1156 = vpop.f32.mrb[0].mxu0
        %v1157 = vadd.f32 0.0, %v1156
        %v1158 = vpop.f32.mrb[0].mxu0
        %v1159 = vpop.f32.mrb[0].mxu0
        %v1160 = vadd.f32 0.0, %v1159
        %v1161 = vpop.f32.mrb[0].mxu0
        %1162 = vmatprep.mubr.bf16.mxu0 0
        %1163 = vmatmul.mubr.bf16.gmra.mrb[0].mxu0 %v1020
        %v1164 = vpop.f32.mrb[0].mxu0
        %v1165 = vadd.f32 0.0, %v1164
        %v1166 = vpop.f32.mrb[0].mxu0
        %v1167 = vpop.f32.mrb[0].mxu0
        %v1168 = vadd.f32 0.0, %v1167
        %v1169 = vpop.f32.mrb[0].mxu0
        %1170 = vmatprep.mubr.bf16.mxu0 0
        %1171 = vmatmul.mubr.bf16.gmra.mrb[0].mxu0 %v1021
        %v1172 = vpop.f32.mrb[0].mxu0
        %v1173 = vadd.f32 0.0, %v1172
        %v1174 = vpop.f32.mrb[0].mxu0
        %v1175 = vpop.f32.mrb[0].mxu0
        %v1176 = vadd.f32 0.0, %v1175
        %v1177 = vpop.f32.mrb[0].mxu0
        %1178 = vmatprep.mubr.bf16.mxu0 0
        %1179 = vmatmul.mubr.bf16.gmra.mrb[0].mxu0 %v1022
        %v1180 = vpop.f32.mrb[0].mxu0
        %v1181 = vadd.f32 0.0, %v1180
        %v1182 = vpop.f32.mrb[0].mxu0
        %v1183 = vpop.f32.mrb[0].mxu0
        %v1184 = vadd.f32 0.0, %v1183
        %v1185 = vpop.f32.mrb[0].mxu0
        %1186 = vmatprep.mubr.bf16.mxu0 0
        %1187 = vmatmul.mubr.bf16.gmra.mrb[0].mxu0 %v1023
        %v1188 = vpop.f32.mrb[0].mxu0
        %v1189 = vadd.f32 0.0, %v1188
        %v1190 = vpop.f32.mrb[0].mxu0
        %v1191 = vpop.f32.mrb[0].mxu0
        %v1192 = vadd.f32 0.0, %v1191
        %v1193 = vpop.f32.mrb[0].mxu0
        %1194 = vmatprep.mubr.bf16.mxu0 0
        %1195 = vmatmul.mubr.bf16.gmra.mrb[0].mxu0 %v1024
        %v1196 = vpop.f32.mrb[0].mxu0
        %v1197 = vadd.f32 0.0, %v1196
        %v1198 = vpop.f32.mrb[0].mxu0
        %v1199 = vpop.f32.mrb[0].mxu0
        %v1200 = vadd.f32 0.0, %v1199
        %v1201 = vpop.f32.mrb[0].mxu0
        %1202 = vmatprep.mubr.bf16.mxu0 0
        %1203 = vmatmul.mubr.bf16.gmra.mrb[0].mxu0 %v1025
        %v1204 = vpop.f32.mrb[0].mxu0
        %v1205 = vadd.f32 0.0, %v1204
        %v1206 = vpop.f32.mrb[0].mxu0
        %v1207 = vpop.f32.mrb[0].mxu0
        %v1208 = vadd.f32 0.0, %v1207
        %v1209 = vpop.f32.mrb[0].mxu0
        %1210 = vmatprep.mubr.bf16.mxu0 0
        %1211 = vmatmul.mubr.bf16.gmra.mrb[0].mxu0 %v1026
        %v1212 = vpop.f32.mrb[0].mxu0
        %v1213 = vadd.f32 0.0, %v1212
        %v1214 = vpop.f32.mrb[0].mxu0
        %v1215 = vpop.f32.mrb[0].mxu0
        %v1216 = vadd.f32 0.0, %v1215
        %v1217 = vpop.f32.mrb[0].mxu0
        %1218 = vmatprep.mubr.bf16.mxu0 0
        %1219 = vmatmul.mubr.bf16.gmra.mrb[0].mxu0 %v1027
        %v1220 = vpop.f32.mrb[0].mxu0
        %v1221 = vadd.f32 0.0, %v1220
        %v1222 = vpop.f32.mrb[0].mxu0
        %v1223 = vpop.f32.mrb[0].mxu0
        %v1224 = vadd.f32 0.0, %v1223
        %v1225 = vpop.f32.mrb[0].mxu0
        %1226 = vmatprep.mubr.bf16.mxu0 0
        %1227 = vmatmul.mubr.bf16.gmra.mrb[0].mxu0 %v1028
        %v1228 = vpop.f32.mrb[0].mxu0
        %v1229 = vadd.f32 0.0, %v1228
        %v1230 = vpop.f32.mrb[0].mxu0
        %v1231 = vpop.f32.mrb[0].mxu0
        %v1232 = vadd.f32 0.0, %v1231
        %v1233 = vpop.f32.mrb[0].mxu0
        %1234 = vmatprep.mubr.bf16.mxu0 0
        %1235 = vmatmul.mubr.bf16.gmra.mrb[0].mxu0 %v1029
        %v1236 = vpop.f32.mrb[0].mxu0
        %v1237 = vadd.f32 0.0, %v1236
        %v1238 = vpop.f32.mrb[0].mxu0
        %v1239 = vpop.f32.mrb[0].mxu0
        %v1240 = vadd.f32 0.0, %v1239
        %v1241 = vpop.f32.mrb[0].mxu0
        %1242 = vmatprep.mubr.bf16.mxu0 0
        %1243 = vmatmul.mubr.bf16.gmra.mrb[0].mxu0 %v1030
        %v1244 = vpop.f32.mrb[0].mxu0
        %v1245 = vadd.f32 0.0, %v1244
        %v1246 = vpop.f32.mrb[0].mxu0
        %v1247 = vpop.f32.mrb[0].mxu0
        %v1248 = vadd.f32 0.0, %v1247
        %v1249 = vpop.f32.mrb[0].mxu0
        %1250 = vmatprep.mubr.bf16.mxu0 0
        %1251 = vmatmul.mubr.bf16.gmra.mrb[0].mxu0 %v1031
        %v1252 = vpop.f32.mrb[0].mxu0
        %v1253 = vadd.f32 0.0, %v1252
        %v1254 = vpop.f32.mrb[0].mxu0
        %v1255 = vpop.f32.mrb[0].mxu0
        %v1256 = vadd.f32 0.0, %v1255
        %v1257 = vpop.f32.mrb[0].mxu0
        %1258 = vmatprep.mubr.bf16.mxu0 0
        %1259 = vmatmul.mubr.bf16.gmra.mrb[0].mxu0 %v1032
        %v1260 = vpop.f32.mrb[0].mxu0
        %v1261 = vadd.f32 0.0, %v1260
        %v1262 = vpop.f32.mrb[0].mxu0
        %v1263 = vpop.f32.mrb[0].mxu0
        %v1264 = vadd.f32 0.0, %v1263
        %v1265 = vpop.f32.mrb[0].mxu0
        %1266 = vmatprep.mubr.bf16.mxu0 0
        %1267 = vmatmul.mubr.bf16.gmra.mrb[0].mxu0 %v1033
        %v1268 = vpop.f32.mrb[0].mxu0
        %v1269 = vadd.f32 0.0, %v1268
        %v1270 = vpop.f32.mrb[0].mxu0
        %v1271 = vpop.f32.mrb[0].mxu0
        %v1272 = vadd.f32 0.0, %v1271
        %v1273 = vpop.f32.mrb[0].mxu0
        %1274 = vmatprep.mubr.bf16.mxu0 0
        %1275 = vmatmul.mubr.bf16.gmra.mrb[0].mxu0 %v1034
        %v1276 = vpop.f32.mrb[0].mxu0
        %v1277 = vadd.f32 0.0, %v1276
        %v1278 = vpop.f32.mrb[0].mxu0
        %v1279 = vpop.f32.mrb[0].mxu0
        %v1280 = vadd.f32 0.0, %v1279
        %v1281 = vpop.f32.mrb[0].mxu0
        %1282 = vmatprep.mubr.bf16.mxu0 0
        %1283 = vmatmul.mubr.bf16.gmra.mrb[0].mxu0 %v1035
        %v1284 = vpop.f32.mrb[0].mxu0
        %v1285 = vadd.f32 0.0, %v1284
        %v1286 = vpop.f32.mrb[0].mxu0
        %v1287 = vpop.f32.mrb[0].mxu0
        %v1288 = vadd.f32 0.0, %v1287
        %v1289 = vpop.f32.mrb[0].mxu0
        %1290 = vmatprep.mubr.bf16.mxu0 0
        %1291 = vmatmul.mubr.bf16.gmra.mrb[0].mxu0 %v1036
        %v1292 = vpop.f32.mrb[0].mxu0
        %v1293 = vadd.f32 0.0, %v1292
        %v1294 = vpop.f32.mrb[0].mxu0
        %v1295 = vpop.f32.mrb[0].mxu0
        %v1296 = vadd.f32 0.0, %v1295
        %v1297 = vpop.f32.mrb[0].mxu0
        %1298 = vmatprep.mubr.bf16.mxu0 0
        %1299 = vmatmul.mubr.bf16.gmra.mrb[0].mxu0 %v1037
        %v1300 = vpop.f32.mrb[0].mxu0
        %v1301 = vadd.f32 0.0, %v1300
        %v1302 = vpop.f32.mrb[0].mxu0
        %v1303 = vpop.f32.mrb[0].mxu0
        %v1304 = vadd.f32 0.0, %v1303
        %v1305 = vpop.f32.mrb[0].mxu0
        %1306 = vmatprep.mubr.bf16.mxu0 0
        %1307 = vmatmul.mubr.bf16.gmra.mrb[0].mxu0 %v1038
        %v1308 = vpop.f32.mrb[0].mxu0
        %v1309 = vadd.f32 0.0, %v1308
        %v1310 = vpop.f32.mrb[0].mxu0
        %v1311 = vpop.f32.mrb[0].mxu0
        %v1312 = vadd.f32 0.0, %v1311
        %v1313 = vpop.f32.mrb[0].mxu0
        %1314 = vmatprep.mubr.bf16.mxu0 0
        %1315 = vmatmul.mubr.bf16.gmra.mrb[0].mxu0 %v1039
        %v1316 = vpop.f32.mrb[0].mxu0
        %v1317 = vadd.f32 0.0, %v1316
        %v1318 = vpop.f32.mrb[0].mxu0
        %v1319 = vpop.f32.mrb[0].mxu0
        %v1320 = vadd.f32 0.0, %v1319
        %v1321 = vpop.f32.mrb[0].mxu0
        %1322 = vmatprep.mubr.bf16.mxu0 0
        %1323 = vmatmul.mubr.bf16.gmra.mrb[0].mxu0 %v1040
        %v1324 = vpop.f32.mrb[0].mxu0
        %v1325 = vadd.f32 0.0, %v1324
        %v1326 = vpop.f32.mrb[0].mxu0
        %v1327 = vpop.f32.mrb[0].mxu0
        %v1328 = vadd.f32 0.0, %v1327
        %v1329 = vpop.f32.mrb[0].mxu0
        %1330 = vmatprep.mubr.bf16.mxu0 0
        %1331 = vmatmul.mubr.bf16.gmra.mrb[0].mxu0 %v1041
        %v1332 = vpop.f32.mrb[0].mxu0
        %v1333 = vadd.f32 0.0, %v1332
        %v1334 = vpop.f32.mrb[0].mxu0
        %v1335 = vpop.f32.mrb[0].mxu0
        %v1336 = vadd.f32 0.0, %v1335
        %v1337 = vpop.f32.mrb[0].mxu0
        %1338 = vdwg.mxu0
        %v1339 = vld [vmem:[#allocation3] sm:$0xff]
        %v1340 = vld [vmem:[#allocation3 + $0x8] sm:$0xff]
        %v1341 = vld [vmem:[#allocation3 + $0x10] sm:$0xff]
        %v1342 = vld [vmem:[#allocation3 + $0x18] sm:$0xff]
        %v1343 = vld [vmem:[#allocation3 + $0x20] sm:$0xff]
        %v1344 = vld [vmem:[#allocation3 + $0x28] sm:$0xff]
        %v1345 = vld [vmem:[#allocation3 + $0x30] sm:$0xff]
        %v1346 = vld [vmem:[#allocation3 + $0x38] sm:$0xff]
        %v1347 = vld [vmem:[#allocation3 + $0x40] sm:$0xff]
        %v1348 = vld [vmem:[#allocation3 + $0x48] sm:$0xff]
        %v1349 = vld [vmem:[#allocation3 + $0x50] sm:$0xff]
        %v1350 = vld [vmem:[#allocation3 + $0x58] sm:$0xff]
        %v1351 = vld [vmem:[#allocation3 + $0x60] sm:$0xff]
        %v1352 = vld [vmem:[#allocation3 + $0x68] sm:$0xff]
        %v1353 = vld [vmem:[#allocation3 + $0x70] sm:$0xff]
        %v1354 = vld [vmem:[#allocation3 + $0x78] sm:$0xff]
        %v1355 = vld [vmem:[#allocation3 + $0x80] sm:$0xff]
        %v1356 = vld [vmem:[#allocation3 + $0x88] sm:$0xff]
        %v1357 = vld [vmem:[#allocation3 + $0x90] sm:$0xff]
        %v1358 = vld [vmem:[#allocation3 + $0x98] sm:$0xff]
        %v1359 = vld [vmem:[#allocation3 + $0xa0] sm:$0xff]
        %v1360 = vld [vmem:[#allocation3 + $0xa8] sm:$0xff]
        %v1361 = vld [vmem:[#allocation3 + $0xb0] sm:$0xff]
        %v1362 = vld [vmem:[#allocation3 + $0xb8] sm:$0xff]
        %v1363 = vld [vmem:[#allocation3 + $0xc0] sm:$0xff]
        %v1364 = vld [vmem:[#allocation3 + $0xc8] sm:$0xff]
        %v1365 = vld [vmem:[#allocation3 + $0xd0] sm:$0xff]
        %v1366 = vld [vmem:[#allocation3 + $0xd8] sm:$0xff]
        %v1367 = vld [vmem:[#allocation3 + $0xe0] sm:$0xff]
        %v1368 = vld [vmem:[#allocation3 + $0xe8] sm:$0xff]
        %v1369 = vld [vmem:[#allocation3 + $0xf0] sm:$0xff]
        %v1370 = vld [vmem:[#allocation3 + $0xf8] sm:$0xff]
        %v1371 = vld [vmem:[#allocation3 + $0x100] sm:$0xff]
        %v1372 = vld [vmem:[#allocation3 + $0x108] sm:$0xff]
        %v1373 = vld [vmem:[#allocation3 + $0x110] sm:$0xff]
        %v1374 = vld [vmem:[#allocation3 + $0x118] sm:$0xff]
        %v1375 = vld [vmem:[#allocation3 + $0x120] sm:$0xff]
        %v1376 = vld [vmem:[#allocation3 + $0x128] sm:$0xff]
        %v1377 = vld [vmem:[#allocation3 + $0x130] sm:$0xff]
        %v1378 = vld [vmem:[#allocation3 + $0x138] sm:$0xff]
        %v1379 = vld [vmem:[#allocation3 + $0x140] sm:$0xff]
        %v1380 = vld [vmem:[#allocation3 + $0x148] sm:$0xff]
        %v1381 = vld [vmem:[#allocation3 + $0x150] sm:$0xff]
        %v1382 = vld [vmem:[#allocation3 + $0x158] sm:$0xff]
        %v1383 = vld [vmem:[#allocation3 + $0x160] sm:$0xff]
        %v1384 = vld [vmem:[#allocation3 + $0x168] sm:$0xff]
        %v1385 = vld [vmem:[#allocation3 + $0x170] sm:$0xff]
        %v1386 = vld [vmem:[#allocation3 + $0x178] sm:$0xff]
        %v1387 = vadd.f32 %v1339, %v1149
        %v1388 = vadd.f32 %v1340, %v1152
        %v1389 = vadd.f32 %v1341, %v1157
        %v1390 = vadd.f32 %v1342, %v1160
        %v1391 = vadd.f32 %v1343, %v1165
        %v1392 = vadd.f32 %v1344, %v1168
        %v1393 = vadd.f32 %v1345, %v1173
        %v1394 = vadd.f32 %v1346, %v1176
        %v1395 = vadd.f32 %v1347, %v1181
        %v1396 = vadd.f32 %v1348, %v1184
        %v1397 = vadd.f32 %v1349, %v1189
        %v1398 = vadd.f32 %v1350, %v1192
        %v1399 = vadd.f32 %v1351, %v1197
        %v1400 = vadd.f32 %v1352, %v1200
        %v1401 = vadd.f32 %v1353, %v1205
        %v1402 = vadd.f32 %v1354, %v1208
        %v1403 = vadd.f32 %v1355, %v1213
        %v1404 = vadd.f32 %v1356, %v1216
        %v1405 = vadd.f32 %v1357, %v1221
        %v1406 = vadd.f32 %v1358, %v1224
        %v1407 = vadd.f32 %v1359, %v1229
        %v1408 = vadd.f32 %v1360, %v1232
        %v1409 = vadd.f32 %v1361, %v1237
        %v1410 = vadd.f32 %v1362, %v1240
        %v1411 = vadd.f32 %v1363, %v1245
        %v1412 = vadd.f32 %v1364, %v1248
        %v1413 = vadd.f32 %v1365, %v1253
        %v1414 = vadd.f32 %v1366, %v1256
        %v1415 = vadd.f32 %v1367, %v1261
        %v1416 = vadd.f32 %v1368, %v1264
        %v1417 = vadd.f32 %v1369, %v1269
        %v1418 = vadd.f32 %v1370, %v1272
        %v1419 = vadd.f32 %v1371, %v1277
        %v1420 = vadd.f32 %v1372, %v1280
        %v1421 = vadd.f32 %v1373, %v1285
        %v1422 = vadd.f32 %v1374, %v1288
        %v1423 = vadd.f32 %v1375, %v1293
        %v1424 = vadd.f32 %v1376, %v1296
        %v1425 = vadd.f32 %v1377, %v1301
        %v1426 = vadd.f32 %v1378, %v1304
        %v1427 = vadd.f32 %v1379, %v1309
        %v1428 = vadd.f32 %v1380, %v1312
        %v1429 = vadd.f32 %v1381, %v1317
        %v1430 = vadd.f32 %v1382, %v1320
        %v1431 = vadd.f32 %v1383, %v1325
        %v1432 = vadd.f32 %v1384, %v1328
        %v1433 = vadd.f32 %v1385, %v1333
        %v1434 = vadd.f32 %v1386, %v1336
        %1435 = vst [vmem:[#allocation3] sm:$0xff] %v1387
        %1436 = vst [vmem:[#allocation3 + $0x8] sm:$0xff] %v1388
        %1437 = vst [vmem:[#allocation3 + $0x10] sm:$0xff] %v1389
        %1438 = vst [vmem:[#allocation3 + $0x18] sm:$0xff] %v1390
        %1439 = vst [vmem:[#allocation3 + $0x20] sm:$0xff] %v1391
        %1440 = vst [vmem:[#allocation3 + $0x28] sm:$0xff] %v1392
        %1441 = vst [vmem:[#allocation3 + $0x30] sm:$0xff] %v1393
        %1442 = vst [vmem:[#allocation3 + $0x38] sm:$0xff] %v1394
        %1443 = vst [vmem:[#allocation3 + $0x40] sm:$0xff] %v1395
        %1444 = vst [vmem:[#allocation3 + $0x48] sm:$0xff] %v1396
        %1445 = vst [vmem:[#allocation3 + $0x50] sm:$0xff] %v1397
        %1446 = vst [vmem:[#allocation3 + $0x58] sm:$0xff] %v1398
        %1447 = vst [vmem:[#allocation3 + $0x60] sm:$0xff] %v1399
        %1448 = vst [vmem:[#allocation3 + $0x68] sm:$0xff] %v1400
        %1449 = vst [vmem:[#allocation3 + $0x70] sm:$0xff] %v1401
        %1450 = vst [vmem:[#allocation3 + $0x78] sm:$0xff] %v1402
        %1451 = vst [vmem:[#allocation3 + $0x80] sm:$0xff] %v1403
        %1452 = vst [vmem:[#allocation3 + $0x88] sm:$0xff] %v1404
        %1453 = vst [vmem:[#allocation3 + $0x90] sm:$0xff] %v1405
        %1454 = vst [vmem:[#allocation3 + $0x98] sm:$0xff] %v1406
        %1455 = vst [vmem:[#allocation3 + $0xa0] sm:$0xff] %v1407
        %1456 = vst [vmem:[#allocation3 + $0xa8] sm:$0xff] %v1408
        %1457 = vst [vmem:[#allocation3 + $0xb0] sm:$0xff] %v1409
        %1458 = vst [vmem:[#allocation3 + $0xb8] sm:$0xff] %v1410
        %1459 = vst [vmem:[#allocation3 + $0xc0] sm:$0xff] %v1411
        %1460 = vst [vmem:[#allocation3 + $0xc8] sm:$0xff] %v1412
        %1461 = vst [vmem:[#allocation3 + $0xd0] sm:$0xff] %v1413
        %1462 = vst [vmem:[#allocation3 + $0xd8] sm:$0xff] %v1414
        %1463 = vst [vmem:[#allocation3 + $0xe0] sm:$0xff] %v1415
        %1464 = vst [vmem:[#allocation3 + $0xe8] sm:$0xff] %v1416
        %1465 = vst [vmem:[#allocation3 + $0xf0] sm:$0xff] %v1417
        %1466 = vst [vmem:[#allocation3 + $0xf8] sm:$0xff] %v1418
        %1467 = vst [vmem:[#allocation3 + $0x100] sm:$0xff] %v1419
        %1468 = vst [vmem:[#allocation3 + $0x108] sm:$0xff] %v1420
        %1469 = vst [vmem:[#allocation3 + $0x110] sm:$0xff] %v1421
        %1470 = vst [vmem:[#allocation3 + $0x118] sm:$0xff] %v1422
        %1471 = vst [vmem:[#allocation3 + $0x120] sm:$0xff] %v1423
        %1472 = vst [vmem:[#allocation3 + $0x128] sm:$0xff] %v1424
        %1473 = vst [vmem:[#allocation3 + $0x130] sm:$0xff] %v1425
        %1474 = vst [vmem:[#allocation3 + $0x138] sm:$0xff] %v1426
        %1475 = vst [vmem:[#allocation3 + $0x140] sm:$0xff] %v1427
        %1476 = vst [vmem:[#allocation3 + $0x148] sm:$0xff] %v1428
        %1477 = vst [vmem:[#allocation3 + $0x150] sm:$0xff] %v1429
        %1478 = vst [vmem:[#allocation3 + $0x158] sm:$0xff] %v1430
        %1479 = vst [vmem:[#allocation3 + $0x160] sm:$0xff] %v1431
        %1480 = vst [vmem:[#allocation3 + $0x168] sm:$0xff] %v1432
        %1481 = vst [vmem:[#allocation3 + $0x170] sm:$0xff] %v1433
        %1482 = vst [vmem:[#allocation3 + $0x178] sm:$0xff] %v1434
        %s1483 = sadd.s32 %s318, 2
        %s1484 = sld [smem:[#allocation5 + %s1483]]
        %s1485 = smul.u32 %s1484, 3
        %s1486 = smul.addr %s1485, 4
        %s1487 = scalar_lea.vmem %s230, %s1486 [#allocation6]
        %v1488 = vld [vmem:[%s1487] sm:$0xf]
        %v1489 = vld [vmem:[%s1487 + $0x4] sm:$0xf]
        %v1490 = vld [vmem:[%s1487 + $0x8] sm:$0xf]
        %v1491 = vld [vmem:[%s1487 + $0xc] sm:$0xf]
        %v1492 = vld [vmem:[%s1487 + $0x10] sm:$0xf]
        %v1493 = vld [vmem:[%s1487 + $0x14] sm:$0xf]
        %v1494 = vld [vmem:[%s1487 + $0x18] sm:$0xf]
        %v1495 = vld [vmem:[%s1487 + $0x1c] sm:$0xf]
        %v1496 = vld [vmem:[%s1487 + $0x20] sm:$0xf]
        %v1497 = vld [vmem:[%s1487 + $0x24] sm:$0xf]
        %v1498 = vld [vmem:[%s1487 + $0x28] sm:$0xf]
        %v1499 = vld [vmem:[%s1487 + $0x2c] sm:$0xf]
        %v1500 = vld [vmem:[%s1487 + $0x30] sm:$0xf]
        %v1501 = vld [vmem:[%s1487 + $0x34] sm:$0xf]
        %v1502 = vld [vmem:[%s1487 + $0x38] sm:$0xf]
        %v1503 = vld [vmem:[%s1487 + $0x3c] sm:$0xf]
        %v1504 = vld [vmem:[%s1487 + $0x40] sm:$0xf]
        %v1505 = vld [vmem:[%s1487 + $0x44] sm:$0xf]
        %v1506 = vld [vmem:[%s1487 + $0x48] sm:$0xf]
        %v1507 = vld [vmem:[%s1487 + $0x4c] sm:$0xf]
        %v1508 = vld [vmem:[%s1487 + $0x50] sm:$0xf]
        %v1509 = vld [vmem:[%s1487 + $0x54] sm:$0xf]
        %v1510 = vld [vmem:[%s1487 + $0x58] sm:$0xf]
        %v1511 = vld [vmem:[%s1487 + $0x5c] sm:$0xf]
        %v1512 = vld [vmem:[%s1487 + $0x60] sm:$0xf]
        %v1513 = vld [vmem:[%s1487 + $0x64] sm:$0xf]
        %v1514 = vld [vmem:[%s1487 + $0x68] sm:$0xf]
        %v1515 = vld [vmem:[%s1487 + $0x6c] sm:$0xf]
        %v1516 = vld [vmem:[%s1487 + $0x70] sm:$0xf]
        %v1517 = vld [vmem:[%s1487 + $0x74] sm:$0xf]
        %v1518 = vld [vmem:[%s1487 + $0x78] sm:$0xf]
        %v1519 = vld [vmem:[%s1487 + $0x7c] sm:$0xf]
        %v1520 = vld [vmem:[%s1487 + $0x80] sm:$0xf]
        %v1521 = vld [vmem:[%s1487 + $0x84] sm:$0xf]
        %v1522 = vld [vmem:[%s1487 + $0x88] sm:$0xf]
        %v1523 = vld [vmem:[%s1487 + $0x8c] sm:$0xf]
        %v1524 = vld [vmem:[%s1487 + $0x90] sm:$0xf]
        %v1525 = vld [vmem:[%s1487 + $0x94] sm:$0xf]
        %v1526 = vld [vmem:[%s1487 + $0x98] sm:$0xf]
        %v1527 = vld [vmem:[%s1487 + $0x9c] sm:$0xf]
        %v1528 = vld [vmem:[%s1487 + $0xa0] sm:$0xf]
        %v1529 = vld [vmem:[%s1487 + $0xa4] sm:$0xf]
        %v1530 = vld [vmem:[%s1487 + $0xa8] sm:$0xf]
        %v1531 = vld [vmem:[%s1487 + $0xac] sm:$0xf]
        %v1532 = vld [vmem:[%s1487 + $0xb0] sm:$0xf]
        %v1533 = vld [vmem:[%s1487 + $0xb4] sm:$0xf]
        %v1534 = vld [vmem:[%s1487 + $0xb8] sm:$0xf]
        %v1535 = vld [vmem:[%s1487 + $0xbc] sm:$0xf]
        %s1536 = scalar_lea.vmem %s239, 128 [#allocation9]
        %v1537 = vld [vmem:[%s1536] sm:$0xf]
        %v1538 = vld [vmem:[%s1536 + $0x4] sm:$0xf]
        %v1539 = vld [vmem:[%s1536 + $0x8] sm:$0xf]
        %v1540 = vld [vmem:[%s1536 + $0xc] sm:$0xf]
        %v1541 = vld [vmem:[%s1536 + $0x10] sm:$0xf]
        %v1542 = vld [vmem:[%s1536 + $0x14] sm:$0xf]
        %v1543 = vld [vmem:[%s1536 + $0x18] sm:$0xf]
        %v1544 = vld [vmem:[%s1536 + $0x1c] sm:$0xf]
        %v1545 = vld [vmem:[%s1536 + $0x20] sm:$0xf]
        %v1546 = vld [vmem:[%s1536 + $0x24] sm:$0xf]
        %v1547 = vld [vmem:[%s1536 + $0x28] sm:$0xf]
        %v1548 = vld [vmem:[%s1536 + $0x2c] sm:$0xf]
        %v1549 = vld [vmem:[%s1536 + $0x30] sm:$0xf]
        %v1550 = vld [vmem:[%s1536 + $0x34] sm:$0xf]
        %v1551 = vld [vmem:[%s1536 + $0x38] sm:$0xf]
        %v1552 = vld [vmem:[%s1536 + $0x3c] sm:$0xf]
        %v1601 = vunpack.c.l.b16 %v1488
        %v1602 = vunpack.c.l.b16 %v1489
        %v1603 = vunpack.c.l.b16 %v1490
        %v1604 = vunpack.c.l.b16 %v1491
        %v1605 = vunpack.c.l.b16 %v1492
        %v1606 = vunpack.c.l.b16 %v1493
        %v1607 = vunpack.c.l.b16 %v1494
        %v1608 = vunpack.c.l.b16 %v1495
        %v1609 = vunpack.c.l.b16 %v1496
        %v1610 = vunpack.c.l.b16 %v1497
        %v1611 = vunpack.c.l.b16 %v1498
        %v1612 = vunpack.c.l.b16 %v1499
        %v1613 = vunpack.c.l.b16 %v1500
        %v1614 = vunpack.c.l.b16 %v1501
        %v1615 = vunpack.c.l.b16 %v1502
        %v1616 = vunpack.c.l.b16 %v1503
        %v1617 = vunpack.c.l.b16 %v1504
        %v1618 = vunpack.c.l.b16 %v1505
        %v1619 = vunpack.c.l.b16 %v1506
        %v1620 = vunpack.c.l.b16 %v1507
        %v1621 = vunpack.c.l.b16 %v1508
        %v1622 = vunpack.c.l.b16 %v1509
        %v1623 = vunpack.c.l.b16 %v1510
        %v1624 = vunpack.c.l.b16 %v1511
        %v1625 = vunpack.c.l.b16 %v1512
        %v1626 = vunpack.c.l.b16 %v1513
        %v1627 = vunpack.c.l.b16 %v1514
        %v1628 = vunpack.c.l.b16 %v1515
        %v1629 = vunpack.c.l.b16 %v1516
        %v1630 = vunpack.c.l.b16 %v1517
        %v1631 = vunpack.c.l.b16 %v1518
        %v1632 = vunpack.c.l.b16 %v1519
        %v1633 = vunpack.c.l.b16 %v1520
        %v1634 = vunpack.c.l.b16 %v1521
        %v1635 = vunpack.c.l.b16 %v1522
        %v1636 = vunpack.c.l.b16 %v1523
        %v1637 = vunpack.c.l.b16 %v1524
        %v1638 = vunpack.c.l.b16 %v1525
        %v1639 = vunpack.c.l.b16 %v1526
        %v1640 = vunpack.c.l.b16 %v1527
        %v1641 = vunpack.c.l.b16 %v1528
        %v1642 = vunpack.c.l.b16 %v1529
        %v1643 = vunpack.c.l.b16 %v1530
        %v1644 = vunpack.c.l.b16 %v1531
        %v1645 = vunpack.c.l.b16 %v1532
        %v1646 = vunpack.c.l.b16 %v1533
        %v1647 = vunpack.c.l.b16 %v1534
        %v1648 = vunpack.c.l.b16 %v1535
        %v1649 = vpack.c.b16 %v1602, %v1601
        %v1650 = vpack.c.b16 %v1604, %v1603
        %v1651 = vpack.c.b16 %v1606, %v1605
        %v1652 = vpack.c.b16 %v1608, %v1607
        %v1653 = vpack.c.b16 %v1610, %v1609
        %v1654 = vpack.c.b16 %v1612, %v1611
        %v1655 = vpack.c.b16 %v1614, %v1613
        %v1656 = vpack.c.b16 %v1616, %v1615
        %v1657 = vpack.c.b16 %v1618, %v1617
        %v1658 = vpack.c.b16 %v1620, %v1619
        %v1659 = vpack.c.b16 %v1622, %v1621
        %v1660 = vpack.c.b16 %v1624, %v1623
        %v1661 = vpack.c.b16 %v1626, %v1625
        %v1662 = vpack.c.b16 %v1628, %v1627
        %v1663 = vpack.c.b16 %v1630, %v1629
        %v1664 = vpack.c.b16 %v1632, %v1631
        %v1665 = vpack.c.b16 %v1634, %v1633
        %v1666 = vpack.c.b16 %v1636, %v1635
        %v1667 = vpack.c.b16 %v1638, %v1637
        %v1668 = vpack.c.b16 %v1640, %v1639
        %v1669 = vpack.c.b16 %v1642, %v1641
        %v1670 = vpack.c.b16 %v1644, %v1643
        %v1671 = vpack.c.b16 %v1646, %v1645
        %v1672 = vpack.c.b16 %v1648, %v1647
        %v1713 = vunpack.c.l.b16 %v1537
        %v1714 = vunpack.c.l.b16 %v1538
        %v1715 = vunpack.c.l.b16 %v1539
        %v1716 = vunpack.c.l.b16 %v1540
        %v1717 = vunpack.c.l.b16 %v1541
        %v1718 = vunpack.c.l.b16 %v1542
        %v1719 = vunpack.c.l.b16 %v1543
        %v1720 = vunpack.c.l.b16 %v1544
        %v1721 = vunpack.c.l.b16 %v1545
        %v1722 = vunpack.c.l.b16 %v1546
        %v1723 = vunpack.c.l.b16 %v1547
        %v1724 = vunpack.c.l.b16 %v1548
        %v1725 = vunpack.c.l.b16 %v1549
        %v1726 = vunpack.c.l.b16 %v1550
        %v1727 = vunpack.c.l.b16 %v1551
        %v1728 = vunpack.c.l.b16 %v1552
        %v1729 = vpack.c.b16 %v1714, %v1713
        %v1730 = vpack.c.b16 %v1716, %v1715
        %v1731 = vpack.c.b16 %v1718, %v1717
        %v1732 = vpack.c.b16 %v1720, %v1719
        %v1733 = vpack.c.b16 %v1722, %v1721
        %v1734 = vpack.c.b16 %v1724, %v1723
        %v1735 = vpack.c.b16 %v1726, %v1725
        %v1736 = vpack.c.b16 %v1728, %v1727
        %1745 = vmatprep.subr.bf16.mxu0 0
        %1746 = vmatpush1.bf16.msra.mxu0 %v1729
        %1747 = vmatprep.subr.bf16.mxu0 0
        %1748 = vmatpush1.bf16.msra.mxu0 %v1730
        %1749 = vmatprep.subr.bf16.mxu0 0
        %1750 = vmatpush1.bf16.msra.mxu0 %v1731
        %1751 = vmatprep.subr.bf16.mxu0 0
        %1752 = vmatpush1.bf16.msra.mxu0 %v1732
        %1753 = vmatprep.subr.bf16.mxu0 0
        %1754 = vmatpush1.bf16.msra.mxu0 %v1733
        %1755 = vmatprep.subr.bf16.mxu0 0
        %1756 = vmatpush1.bf16.msra.mxu0 %v1734
        %1757 = vmatprep.subr.bf16.mxu0 0
        %1758 = vmatpush1.bf16.msra.mxu0 %v1735
        %1759 = vmatprep.subr.bf16.mxu0 0
        %1760 = vmatpush1.bf16.msra.mxu0 %v1736
        %1761 = vmatprep.subr.bf16.mxu0 0
        %1762 = vmatpush1.bf16.msra.mxu0 0
        %1763 = vmatprep.subr.bf16.mxu0 0
        %1764 = vmatpush1.bf16.msra.mxu0 0
        %1765 = vmatprep.subr.bf16.mxu0 0
        %1766 = vmatpush1.bf16.msra.mxu0 0
        %1767 = vmatprep.subr.bf16.mxu0 0
        %1768 = vmatpush1.bf16.msra.mxu0 0
        %1769 = vmatprep.subr.bf16.mxu0 0
        %1770 = vmatpush1.bf16.msra.mxu0 0
        %1771 = vmatprep.subr.bf16.mxu0 0
        %1772 = vmatpush1.bf16.msra.mxu0 0
        %1773 = vmatprep.subr.bf16.mxu0 0
        %1774 = vmatpush1.bf16.msra.mxu0 0
        %1775 = vmatprep.subr.bf16.mxu0 0
        %1776 = vmatpush1.bf16.msra.mxu0 0
        %1777 = vmatprep.mubr.bf16.mxu0 0
        %1778 = vmatmul.mubr.bf16.gmra.mrb[0].mxu0 %v1649
        %v1779 = vpop.f32.mrb[0].mxu0
        %v1780 = vadd.f32 0.0, %v1779
        %v1781 = vpop.f32.mrb[0].mxu0
        %v1782 = vpop.f32.mrb[0].mxu0
        %v1783 = vadd.f32 0.0, %v1782
        %v1784 = vpop.f32.mrb[0].mxu0
        %1785 = vmatprep.mubr.bf16.mxu0 0
        %1786 = vmatmul.mubr.bf16.gmra.mrb[0].mxu0 %v1650
        %v1787 = vpop.f32.mrb[0].mxu0
        %v1788 = vadd.f32 0.0, %v1787
        %v1789 = vpop.f32.mrb[0].mxu0
        %v1790 = vpop.f32.mrb[0].mxu0
        %v1791 = vadd.f32 0.0, %v1790
        %v1792 = vpop.f32.mrb[0].mxu0
        %1793 = vmatprep.mubr.bf16.mxu0 0
        %1794 = vmatmul.mubr.bf16.gmra.mrb[0].mxu0 %v1651
        %v1795 = vpop.f32.mrb[0].mxu0
        %v1796 = vadd.f32 0.0, %v1795
        %v1797 = vpop.f32.mrb[0].mxu0
        %v1798 = vpop.f32.mrb[0].mxu0
        %v1799 = vadd.f32 0.0, %v1798
        %v1800 = vpop.f32.mrb[0].mxu0
        %1801 = vmatprep.mubr.bf16.mxu0 0
        %1802 = vmatmul.mubr.bf16.gmra.mrb[0].mxu0 %v1652
        %v1803 = vpop.f32.mrb[0].mxu0
        %v1804 = vadd.f32 0.0, %v1803
        %v1805 = vpop.f32.mrb[0].mxu0
        %v1806 = vpop.f32.mrb[0].mxu0
        %v1807 = vadd.f32 0.0, %v1806
        %v1808 = vpop.f32.mrb[0].mxu0
        %1809 = vmatprep.mubr.bf16.mxu0 0
        %1810 = vmatmul.mubr.bf16.gmra.mrb[0].mxu0 %v1653
        %v1811 = vpop.f32.mrb[0].mxu0
        %v1812 = vadd.f32 0.0, %v1811
        %v1813 = vpop.f32.mrb[0].mxu0
        %v1814 = vpop.f32.mrb[0].mxu0
        %v1815 = vadd.f32 0.0, %v1814
        %v1816 = vpop.f32.mrb[0].mxu0
        %1817 = vmatprep.mubr.bf16.mxu0 0
        %1818 = vmatmul.mubr.bf16.gmra.mrb[0].mxu0 %v1654
        %v1819 = vpop.f32.mrb[0].mxu0
        %v1820 = vadd.f32 0.0, %v1819
        %v1821 = vpop.f32.mrb[0].mxu0
        %v1822 = vpop.f32.mrb[0].mxu0
        %v1823 = vadd.f32 0.0, %v1822
        %v1824 = vpop.f32.mrb[0].mxu0
        %1825 = vmatprep.mubr.bf16.mxu0 0
        %1826 = vmatmul.mubr.bf16.gmra.mrb[0].mxu0 %v1655
        %v1827 = vpop.f32.mrb[0].mxu0
        %v1828 = vadd.f32 0.0, %v1827
        %v1829 = vpop.f32.mrb[0].mxu0
        %v1830 = vpop.f32.mrb[0].mxu0
        %v1831 = vadd.f32 0.0, %v1830
        %v1832 = vpop.f32.mrb[0].mxu0
        %1833 = vmatprep.mubr.bf16.mxu0 0
        %1834 = vmatmul.mubr.bf16.gmra.mrb[0].mxu0 %v1656
        %v1835 = vpop.f32.mrb[0].mxu0
        %v1836 = vadd.f32 0.0, %v1835
        %v1837 = vpop.f32.mrb[0].mxu0
        %v1838 = vpop.f32.mrb[0].mxu0
        %v1839 = vadd.f32 0.0, %v1838
        %v1840 = vpop.f32.mrb[0].mxu0
        %1841 = vmatprep.mubr.bf16.mxu0 0
        %1842 = vmatmul.mubr.bf16.gmra.mrb[0].mxu0 %v1657
        %v1843 = vpop.f32.mrb[0].mxu0
        %v1844 = vadd.f32 0.0, %v1843
        %v1845 = vpop.f32.mrb[0].mxu0
        %v1846 = vpop.f32.mrb[0].mxu0
        %v1847 = vadd.f32 0.0, %v1846
        %v1848 = vpop.f32.mrb[0].mxu0
        %1849 = vmatprep.mubr.bf16.mxu0 0
        %1850 = vmatmul.mubr.bf16.gmra.mrb[0].mxu0 %v1658
        %v1851 = vpop.f32.mrb[0].mxu0
        %v1852 = vadd.f32 0.0, %v1851
        %v1853 = vpop.f32.mrb[0].mxu0
        %v1854 = vpop.f32.mrb[0].mxu0
        %v1855 = vadd.f32 0.0, %v1854
        %v1856 = vpop.f32.mrb[0].mxu0
        %1857 = vmatprep.mubr.bf16.mxu0 0
        %1858 = vmatmul.mubr.bf16.gmra.mrb[0].mxu0 %v1659
        %v1859 = vpop.f32.mrb[0].mxu0
        %v1860 = vadd.f32 0.0, %v1859
        %v1861 = vpop.f32.mrb[0].mxu0
        %v1862 = vpop.f32.mrb[0].mxu0
        %v1863 = vadd.f32 0.0, %v1862
        %v1864 = vpop.f32.mrb[0].mxu0
        %1865 = vmatprep.mubr.bf16.mxu0 0
        %1866 = vmatmul.mubr.bf16.gmra.mrb[0].mxu0 %v1660
        %v1867 = vpop.f32.mrb[0].mxu0
        %v1868 = vadd.f32 0.0, %v1867
        %v1869 = vpop.f32.mrb[0].mxu0
        %v1870 = vpop.f32.mrb[0].mxu0
        %v1871 = vadd.f32 0.0, %v1870
        %v1872 = vpop.f32.mrb[0].mxu0
        %1873 = vmatprep.mubr.bf16.mxu0 0
        %1874 = vmatmul.mubr.bf16.gmra.mrb[0].mxu0 %v1661
        %v1875 = vpop.f32.mrb[0].mxu0
        %v1876 = vadd.f32 0.0, %v1875
        %v1877 = vpop.f32.mrb[0].mxu0
        %v1878 = vpop.f32.mrb[0].mxu0
        %v1879 = vadd.f32 0.0, %v1878
        %v1880 = vpop.f32.mrb[0].mxu0
        %1881 = vmatprep.mubr.bf16.mxu0 0
        %1882 = vmatmul.mubr.bf16.gmra.mrb[0].mxu0 %v1662
        %v1883 = vpop.f32.mrb[0].mxu0
        %v1884 = vadd.f32 0.0, %v1883
        %v1885 = vpop.f32.mrb[0].mxu0
        %v1886 = vpop.f32.mrb[0].mxu0
        %v1887 = vadd.f32 0.0, %v1886
        %v1888 = vpop.f32.mrb[0].mxu0
        %1889 = vmatprep.mubr.bf16.mxu0 0
        %1890 = vmatmul.mubr.bf16.gmra.mrb[0].mxu0 %v1663
        %v1891 = vpop.f32.mrb[0].mxu0
        %v1892 = vadd.f32 0.0, %v1891
        %v1893 = vpop.f32.mrb[0].mxu0
        %v1894 = vpop.f32.mrb[0].mxu0
        %v1895 = vadd.f32 0.0, %v1894
        %v1896 = vpop.f32.mrb[0].mxu0
        %1897 = vmatprep.mubr.bf16.mxu0 0
        %1898 = vmatmul.mubr.bf16.gmra.mrb[0].mxu0 %v1664
        %v1899 = vpop.f32.mrb[0].mxu0
        %v1900 = vadd.f32 0.0, %v1899
        %v1901 = vpop.f32.mrb[0].mxu0
        %v1902 = vpop.f32.mrb[0].mxu0
        %v1903 = vadd.f32 0.0, %v1902
        %v1904 = vpop.f32.mrb[0].mxu0
        %1905 = vmatprep.mubr.bf16.mxu0 0
        %1906 = vmatmul.mubr.bf16.gmra.mrb[0].mxu0 %v1665
        %v1907 = vpop.f32.mrb[0].mxu0
        %v1908 = vadd.f32 0.0, %v1907
        %v1909 = vpop.f32.mrb[0].mxu0
        %v1910 = vpop.f32.mrb[0].mxu0
        %v1911 = vadd.f32 0.0, %v1910
        %v1912 = vpop.f32.mrb[0].mxu0
        %1913 = vmatprep.mubr.bf16.mxu0 0
        %1914 = vmatmul.mubr.bf16.gmra.mrb[0].mxu0 %v1666
        %v1915 = vpop.f32.mrb[0].mxu0
        %v1916 = vadd.f32 0.0, %v1915
        %v1917 = vpop.f32.mrb[0].mxu0
        %v1918 = vpop.f32.mrb[0].mxu0
        %v1919 = vadd.f32 0.0, %v1918
        %v1920 = vpop.f32.mrb[0].mxu0
        %1921 = vmatprep.mubr.bf16.mxu0 0
        %1922 = vmatmul.mubr.bf16.gmra.mrb[0].mxu0 %v1667
        %v1923 = vpop.f32.mrb[0].mxu0
        %v1924 = vadd.f32 0.0, %v1923
        %v1925 = vpop.f32.mrb[0].mxu0
        %v1926 = vpop.f32.mrb[0].mxu0
        %v1927 = vadd.f32 0.0, %v1926
        %v1928 = vpop.f32.mrb[0].mxu0
        %1929 = vmatprep.mubr.bf16.mxu0 0
        %1930 = vmatmul.mubr.bf16.gmra.mrb[0].mxu0 %v1668
        %v1931 = vpop.f32.mrb[0].mxu0
        %v1932 = vadd.f32 0.0, %v1931
        %v1933 = vpop.f32.mrb[0].mxu0
        %v1934 = vpop.f32.mrb[0].mxu0
        %v1935 = vadd.f32 0.0, %v1934
        %v1936 = vpop.f32.mrb[0].mxu0
        %1937 = vmatprep.mubr.bf16.mxu0 0
        %1938 = vmatmul.mubr.bf16.gmra.mrb[0].mxu0 %v1669
        %v1939 = vpop.f32.mrb[0].mxu0
        %v1940 = vadd.f32 0.0, %v1939
        %v1941 = vpop.f32.mrb[0].mxu0
        %v1942 = vpop.f32.mrb[0].mxu0
        %v1943 = vadd.f32 0.0, %v1942
        %v1944 = vpop.f32.mrb[0].mxu0
        %1945 = vmatprep.mubr.bf16.mxu0 0
        %1946 = vmatmul.mubr.bf16.gmra.mrb[0].mxu0 %v1670
        %v1947 = vpop.f32.mrb[0].mxu0
        %v1948 = vadd.f32 0.0, %v1947
        %v1949 = vpop.f32.mrb[0].mxu0
        %v1950 = vpop.f32.mrb[0].mxu0
        %v1951 = vadd.f32 0.0, %v1950
        %v1952 = vpop.f32.mrb[0].mxu0
        %1953 = vmatprep.mubr.bf16.mxu0 0
        %1954 = vmatmul.mubr.bf16.gmra.mrb[0].mxu0 %v1671
        %v1955 = vpop.f32.mrb[0].mxu0
        %v1956 = vadd.f32 0.0, %v1955
        %v1957 = vpop.f32.mrb[0].mxu0
        %v1958 = vpop.f32.mrb[0].mxu0
        %v1959 = vadd.f32 0.0, %v1958
        %v1960 = vpop.f32.mrb[0].mxu0
        %1961 = vmatprep.mubr.bf16.mxu0 0
        %1962 = vmatmul.mubr.bf16.gmra.mrb[0].mxu0 %v1672
        %v1963 = vpop.f32.mrb[0].mxu0
        %v1964 = vadd.f32 0.0, %v1963
        %v1965 = vpop.f32.mrb[0].mxu0
        %v1966 = vpop.f32.mrb[0].mxu0
        %v1967 = vadd.f32 0.0, %v1966
        %v1968 = vpop.f32.mrb[0].mxu0
        %1969 = vdwg.mxu0
        %v1970 = vld [vmem:[#allocation3] sm:$0xff]
        %v1971 = vld [vmem:[#allocation3 + $0x8] sm:$0xff]
        %v1972 = vld [vmem:[#allocation3 + $0x10] sm:$0xff]
        %v1973 = vld [vmem:[#allocation3 + $0x18] sm:$0xff]
        %v1974 = vld [vmem:[#allocation3 + $0x20] sm:$0xff]
        %v1975 = vld [vmem:[#allocation3 + $0x28] sm:$0xff]
        %v1976 = vld [vmem:[#allocation3 + $0x30] sm:$0xff]
        %v1977 = vld [vmem:[#allocation3 + $0x38] sm:$0xff]
        %v1978 = vld [vmem:[#allocation3 + $0x40] sm:$0xff]
        %v1979 = vld [vmem:[#allocation3 + $0x48] sm:$0xff]
        %v1980 = vld [vmem:[#allocation3 + $0x50] sm:$0xff]
        %v1981 = vld [vmem:[#allocation3 + $0x58] sm:$0xff]
        %v1982 = vld [vmem:[#allocation3 + $0x60] sm:$0xff]
        %v1983 = vld [vmem:[#allocation3 + $0x68] sm:$0xff]
        %v1984 = vld [vmem:[#allocation3 + $0x70] sm:$0xff]
        %v1985 = vld [vmem:[#allocation3 + $0x78] sm:$0xff]
        %v1986 = vld [vmem:[#allocation3 + $0x80] sm:$0xff]
        %v1987 = vld [vmem:[#allocation3 + $0x88] sm:$0xff]
        %v1988 = vld [vmem:[#allocation3 + $0x90] sm:$0xff]
        %v1989 = vld [vmem:[#allocation3 + $0x98] sm:$0xff]
        %v1990 = vld [vmem:[#allocation3 + $0xa0] sm:$0xff]
        %v1991 = vld [vmem:[#allocation3 + $0xa8] sm:$0xff]
        %v1992 = vld [vmem:[#allocation3 + $0xb0] sm:$0xff]
        %v1993 = vld [vmem:[#allocation3 + $0xb8] sm:$0xff]
        %v1994 = vld [vmem:[#allocation3 + $0xc0] sm:$0xff]
        %v1995 = vld [vmem:[#allocation3 + $0xc8] sm:$0xff]
        %v1996 = vld [vmem:[#allocation3 + $0xd0] sm:$0xff]
        %v1997 = vld [vmem:[#allocation3 + $0xd8] sm:$0xff]
        %v1998 = vld [vmem:[#allocation3 + $0xe0] sm:$0xff]
        %v1999 = vld [vmem:[#allocation3 + $0xe8] sm:$0xff]
        %v2000 = vld [vmem:[#allocation3 + $0xf0] sm:$0xff]
        %v2001 = vld [vmem:[#allocation3 + $0xf8] sm:$0xff]
        %v2002 = vld [vmem:[#allocation3 + $0x100] sm:$0xff]
        %v2003 = vld [vmem:[#allocation3 + $0x108] sm:$0xff]
        %v2004 = vld [vmem:[#allocation3 + $0x110] sm:$0xff]
        %v2005 = vld [vmem:[#allocation3 + $0x118] sm:$0xff]
        %v2006 = vld [vmem:[#allocation3 + $0x120] sm:$0xff]
        %v2007 = vld [vmem:[#allocation3 + $0x128] sm:$0xff]
        %v2008 = vld [vmem:[#allocation3 + $0x130] sm:$0xff]
        %v2009 = vld [vmem:[#allocation3 + $0x138] sm:$0xff]
        %v2010 = vld [vmem:[#allocation3 + $0x140] sm:$0xff]
        %v2011 = vld [vmem:[#allocation3 + $0x148] sm:$0xff]
        %v2012 = vld [vmem:[#allocation3 + $0x150] sm:$0xff]
        %v2013 = vld [vmem:[#allocation3 + $0x158] sm:$0xff]
        %v2014 = vld [vmem:[#allocation3 + $0x160] sm:$0xff]
        %v2015 = vld [vmem:[#allocation3 + $0x168] sm:$0xff]
        %v2016 = vld [vmem:[#allocation3 + $0x170] sm:$0xff]
        %v2017 = vld [vmem:[#allocation3 + $0x178] sm:$0xff]
        %v2018 = vadd.f32 %v1970, %v1780
        %v2019 = vadd.f32 %v1971, %v1783
        %v2020 = vadd.f32 %v1972, %v1788
        %v2021 = vadd.f32 %v1973, %v1791
        %v2022 = vadd.f32 %v1974, %v1796
        %v2023 = vadd.f32 %v1975, %v1799
        %v2024 = vadd.f32 %v1976, %v1804
        %v2025 = vadd.f32 %v1977, %v1807
        %v2026 = vadd.f32 %v1978, %v1812
        %v2027 = vadd.f32 %v1979, %v1815
        %v2028 = vadd.f32 %v1980, %v1820
        %v2029 = vadd.f32 %v1981, %v1823
        %v2030 = vadd.f32 %v1982, %v1828
        %v2031 = vadd.f32 %v1983, %v1831
        %v2032 = vadd.f32 %v1984, %v1836
        %v2033 = vadd.f32 %v1985, %v1839
        %v2034 = vadd.f32 %v1986, %v1844
        %v2035 = vadd.f32 %v1987, %v1847
        %v2036 = vadd.f32 %v1988, %v1852
        %v2037 = vadd.f32 %v1989, %v1855
        %v2038 = vadd.f32 %v1990, %v1860
        %v2039 = vadd.f32 %v1991, %v1863
        %v2040 = vadd.f32 %v1992, %v1868
        %v2041 = vadd.f32 %v1993, %v1871
        %v2042 = vadd.f32 %v1994, %v1876
        %v2043 = vadd.f32 %v1995, %v1879
        %v2044 = vadd.f32 %v1996, %v1884
        %v2045 = vadd.f32 %v1997, %v1887
        %v2046 = vadd.f32 %v1998, %v1892
        %v2047 = vadd.f32 %v1999, %v1895
        %v2048 = vadd.f32 %v2000, %v1900
        %v2049 = vadd.f32 %v2001, %v1903
        %v2050 = vadd.f32 %v2002, %v1908
        %v2051 = vadd.f32 %v2003, %v1911
        %v2052 = vadd.f32 %v2004, %v1916
        %v2053 = vadd.f32 %v2005, %v1919
        %v2054 = vadd.f32 %v2006, %v1924
        %v2055 = vadd.f32 %v2007, %v1927
        %v2056 = vadd.f32 %v2008, %v1932
        %v2057 = vadd.f32 %v2009, %v1935
        %v2058 = vadd.f32 %v2010, %v1940
        %v2059 = vadd.f32 %v2011, %v1943
        %v2060 = vadd.f32 %v2012, %v1948
        %v2061 = vadd.f32 %v2013, %v1951
        %v2062 = vadd.f32 %v2014, %v1956
        %v2063 = vadd.f32 %v2015, %v1959
        %v2064 = vadd.f32 %v2016, %v1964
        %v2065 = vadd.f32 %v2017, %v1967
        %2066 = vst [vmem:[#allocation3] sm:$0xff] %v2018
        %2067 = vst [vmem:[#allocation3 + $0x8] sm:$0xff] %v2019
        %2068 = vst [vmem:[#allocation3 + $0x10] sm:$0xff] %v2020
        %2069 = vst [vmem:[#allocation3 + $0x18] sm:$0xff] %v2021
        %2070 = vst [vmem:[#allocation3 + $0x20] sm:$0xff] %v2022
        %2071 = vst [vmem:[#allocation3 + $0x28] sm:$0xff] %v2023
        %2072 = vst [vmem:[#allocation3 + $0x30] sm:$0xff] %v2024
        %2073 = vst [vmem:[#allocation3 + $0x38] sm:$0xff] %v2025
        %2074 = vst [vmem:[#allocation3 + $0x40] sm:$0xff] %v2026
        %2075 = vst [vmem:[#allocation3 + $0x48] sm:$0xff] %v2027
        %2076 = vst [vmem:[#allocation3 + $0x50] sm:$0xff] %v2028
        %2077 = vst [vmem:[#allocation3 + $0x58] sm:$0xff] %v2029
        %2078 = vst [vmem:[#allocation3 + $0x60] sm:$0xff] %v2030
        %2079 = vst [vmem:[#allocation3 + $0x68] sm:$0xff] %v2031
        %2080 = vst [vmem:[#allocation3 + $0x70] sm:$0xff] %v2032
        %2081 = vst [vmem:[#allocation3 + $0x78] sm:$0xff] %v2033
        %2082 = vst [vmem:[#allocation3 + $0x80] sm:$0xff] %v2034
        %2083 = vst [vmem:[#allocation3 + $0x88] sm:$0xff] %v2035
        %2084 = vst [vmem:[#allocation3 + $0x90] sm:$0xff] %v2036
        %2085 = vst [vmem:[#allocation3 + $0x98] sm:$0xff] %v2037
        %2086 = vst [vmem:[#allocation3 + $0xa0] sm:$0xff] %v2038
        %2087 = vst [vmem:[#allocation3 + $0xa8] sm:$0xff] %v2039
        %2088 = vst [vmem:[#allocation3 + $0xb0] sm:$0xff] %v2040
        %2089 = vst [vmem:[#allocation3 + $0xb8] sm:$0xff] %v2041
        %2090 = vst [vmem:[#allocation3 + $0xc0] sm:$0xff] %v2042
        %2091 = vst [vmem:[#allocation3 + $0xc8] sm:$0xff] %v2043
        %2092 = vst [vmem:[#allocation3 + $0xd0] sm:$0xff] %v2044
        %2093 = vst [vmem:[#allocation3 + $0xd8] sm:$0xff] %v2045
        %2094 = vst [vmem:[#allocation3 + $0xe0] sm:$0xff] %v2046
        %2095 = vst [vmem:[#allocation3 + $0xe8] sm:$0xff] %v2047
        %2096 = vst [vmem:[#allocation3 + $0xf0] sm:$0xff] %v2048
        %2097 = vst [vmem:[#allocation3 + $0xf8] sm:$0xff] %v2049
        %2098 = vst [vmem:[#allocation3 + $0x100] sm:$0xff] %v2050
        %2099 = vst [vmem:[#allocation3 + $0x108] sm:$0xff] %v2051
        %2100 = vst [vmem:[#allocation3 + $0x110] sm:$0xff] %v2052
        %2101 = vst [vmem:[#allocation3 + $0x118] sm:$0xff] %v2053
        %2102 = vst [vmem:[#allocation3 + $0x120] sm:$0xff] %v2054
        %2103 = vst [vmem:[#allocation3 + $0x128] sm:$0xff] %v2055
        %2104 = vst [vmem:[#allocation3 + $0x130] sm:$0xff] %v2056
        %2105 = vst [vmem:[#allocation3 + $0x138] sm:$0xff] %v2057
        %2106 = vst [vmem:[#allocation3 + $0x140] sm:$0xff] %v2058
        %2107 = vst [vmem:[#allocation3 + $0x148] sm:$0xff] %v2059
        %2108 = vst [vmem:[#allocation3 + $0x150] sm:$0xff] %v2060
        %2109 = vst [vmem:[#allocation3 + $0x158] sm:$0xff] %v2061
        %2110 = vst [vmem:[#allocation3 + $0x160] sm:$0xff] %v2062
        %2111 = vst [vmem:[#allocation3 + $0x168] sm:$0xff] %v2063
        %2112 = vst [vmem:[#allocation3 + $0x170] sm:$0xff] %v2064
        %2113 = vst [vmem:[#allocation3 + $0x178] sm:$0xff] %v2065
        %s2114 = sadd.s32 %s318, 3
        %s2115 = sld [smem:[#allocation5 + %s2114]]
        %v2116 = vld [vmem:[#allocation2] sm:$0xff]
        %v2117 = vld [vmem:[#allocation2 + $0x8] sm:$0xff]
        %v2118 = vld [vmem:[#allocation2 + $0x10] sm:$0xff]
        %v2119 = vld [vmem:[#allocation2 + $0x18] sm:$0xff]
        %v2120 = vld [vmem:[#allocation2 + $0x20] sm:$0xff]
        %v2121 = vld [vmem:[#allocation2 + $0x28] sm:$0xff]
        %v2122 = vld [vmem:[#allocation2 + $0x30] sm:$0xff]
        %v2123 = vld [vmem:[#allocation2 + $0x38] sm:$0xff]
        %v2124 = vld [vmem:[#allocation2 + $0x40] sm:$0xff]
        %v2125 = vld [vmem:[#allocation2 + $0x48] sm:$0xff]
        %v2126 = vld [vmem:[#allocation2 + $0x50] sm:$0xff]
        %v2127 = vld [vmem:[#allocation2 + $0x58] sm:$0xff]
        %v2128 = vld [vmem:[#allocation2 + $0x60] sm:$0xff]
        %v2129 = vld [vmem:[#allocation2 + $0x68] sm:$0xff]
        %v2130 = vld [vmem:[#allocation2 + $0x70] sm:$0xff]
        %v2131 = vld [vmem:[#allocation2 + $0x78] sm:$0xff]
        %v2132 = vld [vmem:[#allocation2 + $0x80] sm:$0xff]
        %v2133 = vld [vmem:[#allocation2 + $0x88] sm:$0xff]
        %v2134 = vld [vmem:[#allocation2 + $0x90] sm:$0xff]
        %v2135 = vld [vmem:[#allocation2 + $0x98] sm:$0xff]
        %v2136 = vld [vmem:[#allocation2 + $0xa0] sm:$0xff]
        %v2137 = vld [vmem:[#allocation2 + $0xa8] sm:$0xff]
        %v2138 = vld [vmem:[#allocation2 + $0xb0] sm:$0xff]
        %v2139 = vld [vmem:[#allocation2 + $0xb8] sm:$0xff]
        %v2140 = vld [vmem:[#allocation2 + $0xc0] sm:$0xff]
        %v2141 = vld [vmem:[#allocation2 + $0xc8] sm:$0xff]
        %v2142 = vld [vmem:[#allocation2 + $0xd0] sm:$0xff]
        %v2143 = vld [vmem:[#allocation2 + $0xd8] sm:$0xff]
        %v2144 = vld [vmem:[#allocation2 + $0xe0] sm:$0xff]
        %v2145 = vld [vmem:[#allocation2 + $0xe8] sm:$0xff]
        %v2146 = vld [vmem:[#allocation2 + $0xf0] sm:$0xff]
        %v2147 = vld [vmem:[#allocation2 + $0xf8] sm:$0xff]
        %s2148 = scalar_lea.vmem [#allocation3], %s2115
        %v2149 = vld [vmem:[%s2148] sm:$0xff]
        %v2150 = vld [vmem:[%s2148 + $0x8] sm:$0xff]
        %v2151 = vld [vmem:[%s2148 + $0x18] sm:$0xff]
        %v2152 = vld [vmem:[%s2148 + $0x20] sm:$0xff]
        %v2153 = vld [vmem:[%s2148 + $0x30] sm:$0xff]
        %v2154 = vld [vmem:[%s2148 + $0x38] sm:$0xff]
        %v2155 = vld [vmem:[%s2148 + $0x48] sm:$0xff]
        %v2156 = vld [vmem:[%s2148 + $0x50] sm:$0xff]
        %v2157 = vld [vmem:[%s2148 + $0x60] sm:$0xff]
        %v2158 = vld [vmem:[%s2148 + $0x68] sm:$0xff]
        %v2159 = vld [vmem:[%s2148 + $0x78] sm:$0xff]
        %v2160 = vld [vmem:[%s2148 + $0x80] sm:$0xff]
        %v2161 = vld [vmem:[%s2148 + $0x90] sm:$0xff]
        %v2162 = vld [vmem:[%s2148 + $0x98] sm:$0xff]
        %v2163 = vld [vmem:[%s2148 + $0xa8] sm:$0xff]
        %v2164 = vld [vmem:[%s2148 + $0xb0] sm:$0xff]
        %v2165 = vld [vmem:[%s2148 + $0xc0] sm:$0xff]
        %v2166 = vld [vmem:[%s2148 + $0xc8] sm:$0xff]
        %v2167 = vld [vmem:[%s2148 + $0xd8] sm:$0xff]
        %v2168 = vld [vmem:[%s2148 + $0xe0] sm:$0xff]
        %v2169 = vld [vmem:[%s2148 + $0xf0] sm:$0xff]
        %v2170 = vld [vmem:[%s2148 + $0xf8] sm:$0xff]
        %v2171 = vld [vmem:[%s2148 + $0x108] sm:$0xff]
        %v2172 = vld [vmem:[%s2148 + $0x110] sm:$0xff]
        %v2173 = vld [vmem:[%s2148 + $0x120] sm:$0xff]
        %v2174 = vld [vmem:[%s2148 + $0x128] sm:$0xff]
        %v2175 = vld [vmem:[%s2148 + $0x138] sm:$0xff]
        %v2176 = vld [vmem:[%s2148 + $0x140] sm:$0xff]
        %v2177 = vld [vmem:[%s2148 + $0x150] sm:$0xff]
        %v2178 = vld [vmem:[%s2148 + $0x158] sm:$0xff]
        %v2179 = vld [vmem:[%s2148 + $0x168] sm:$0xff]
        %v2180 = vld [vmem:[%s2148 + $0x170] sm:$0xff]
        %v2181 = vadd.f32 %v2116, %v2149
        %v2182 = vadd.f32 %v2117, %v2150
        %v2183 = vadd.f32 %v2118, %v2151
        %v2184 = vadd.f32 %v2119, %v2152
        %v2185 = vadd.f32 %v2120, %v2153
        %v2186 = vadd.f32 %v2121, %v2154
        %v2187 = vadd.f32 %v2122, %v2155
        %v2188 = vadd.f32 %v2123, %v2156
        %v2189 = vadd.f32 %v2124, %v2157
        %v2190 = vadd.f32 %v2125, %v2158
        %v2191 = vadd.f32 %v2126, %v2159
        %v2192 = vadd.f32 %v2127, %v2160
        %v2193 = vadd.f32 %v2128, %v2161
        %v2194 = vadd.f32 %v2129, %v2162
        %v2195 = vadd.f32 %v2130, %v2163
        %v2196 = vadd.f32 %v2131, %v2164
        %v2197 = vadd.f32 %v2132, %v2165
        %v2198 = vadd.f32 %v2133, %v2166
        %v2199 = vadd.f32 %v2134, %v2167
        %v2200 = vadd.f32 %v2135, %v2168
        %v2201 = vadd.f32 %v2136, %v2169
        %v2202 = vadd.f32 %v2137, %v2170
        %v2203 = vadd.f32 %v2138, %v2171
        %v2204 = vadd.f32 %v2139, %v2172
        %v2205 = vadd.f32 %v2140, %v2173
        %v2206 = vadd.f32 %v2141, %v2174
        %v2207 = vadd.f32 %v2142, %v2175
        %v2208 = vadd.f32 %v2143, %v2176
        %v2209 = vadd.f32 %v2144, %v2177
        %v2210 = vadd.f32 %v2145, %v2178
        %v2211 = vadd.f32 %v2146, %v2179
        %v2212 = vadd.f32 %v2147, %v2180
        %2213 = vst [vmem:[#allocation2] sm:$0xff] %v2181
        %2214 = vst [vmem:[#allocation2 + $0x8] sm:$0xff] %v2182
        %2215 = vst [vmem:[#allocation2 + $0x10] sm:$0xff] %v2183
        %2216 = vst [vmem:[#allocation2 + $0x18] sm:$0xff] %v2184
        %2217 = vst [vmem:[#allocation2 + $0x20] sm:$0xff] %v2185
        %2218 = vst [vmem:[#allocation2 + $0x28] sm:$0xff] %v2186
        %2219 = vst [vmem:[#allocation2 + $0x30] sm:$0xff] %v2187
        %2220 = vst [vmem:[#allocation2 + $0x38] sm:$0xff] %v2188
        %2221 = vst [vmem:[#allocation2 + $0x40] sm:$0xff] %v2189
        %2222 = vst [vmem:[#allocation2 + $0x48] sm:$0xff] %v2190
        %2223 = vst [vmem:[#allocation2 + $0x50] sm:$0xff] %v2191
        %2224 = vst [vmem:[#allocation2 + $0x58] sm:$0xff] %v2192
        %2225 = vst [vmem:[#allocation2 + $0x60] sm:$0xff] %v2193
        %2226 = vst [vmem:[#allocation2 + $0x68] sm:$0xff] %v2194
        %2227 = vst [vmem:[#allocation2 + $0x70] sm:$0xff] %v2195
        %2228 = vst [vmem:[#allocation2 + $0x78] sm:$0xff] %v2196
        %2229 = vst [vmem:[#allocation2 + $0x80] sm:$0xff] %v2197
        %2230 = vst [vmem:[#allocation2 + $0x88] sm:$0xff] %v2198
        %2231 = vst [vmem:[#allocation2 + $0x90] sm:$0xff] %v2199
        %2232 = vst [vmem:[#allocation2 + $0x98] sm:$0xff] %v2200
        %2233 = vst [vmem:[#allocation2 + $0xa0] sm:$0xff] %v2201
        %2234 = vst [vmem:[#allocation2 + $0xa8] sm:$0xff] %v2202
        %2235 = vst [vmem:[#allocation2 + $0xb0] sm:$0xff] %v2203
        %2236 = vst [vmem:[#allocation2 + $0xb8] sm:$0xff] %v2204
        %2237 = vst [vmem:[#allocation2 + $0xc0] sm:$0xff] %v2205
        %2238 = vst [vmem:[#allocation2 + $0xc8] sm:$0xff] %v2206
        %2239 = vst [vmem:[#allocation2 + $0xd0] sm:$0xff] %v2207
        %2240 = vst [vmem:[#allocation2 + $0xd8] sm:$0xff] %v2208
        %2241 = vst [vmem:[#allocation2 + $0xe0] sm:$0xff] %v2209
        %2242 = vst [vmem:[#allocation2 + $0xe8] sm:$0xff] %v2210
        %2243 = vst [vmem:[#allocation2 + $0xf0] sm:$0xff] %v2211
        %2244 = vst [vmem:[#allocation2 + $0xf8] sm:$0xff] %v2212
        %p2245 = scmp.eq.s32.totalorder %s35, 2
        // Predicated region
        $region45: #{tpu_custom_call.1} parent=31 // pred_check
          %p2246 = pneg %p2245
        $region46: #{tpu_custom_call.1} parent=31 // pred_check_branch
          %2248 = sbr.rel (%p2246) target = $region48
        $region47: #{tpu_custom_call.1} parent=31 // pred_region
          %v2249 = vld [vmem:[#allocation2] sm:$0xff]
          %v2250 = vld [vmem:[#allocation2 + $0x8] sm:$0xff]
          %v2251 = vld [vmem:[#allocation2 + $0x10] sm:$0xff]
          %v2252 = vld [vmem:[#allocation2 + $0x18] sm:$0xff]
          %v2253 = vld [vmem:[#allocation2 + $0x20] sm:$0xff]
          %v2254 = vld [vmem:[#allocation2 + $0x28] sm:$0xff]
          %v2255 = vld [vmem:[#allocation2 + $0x30] sm:$0xff]
          %v2256 = vld [vmem:[#allocation2 + $0x38] sm:$0xff]
          %v2257 = vld [vmem:[#allocation2 + $0x40] sm:$0xff]
          %v2258 = vld [vmem:[#allocation2 + $0x48] sm:$0xff]
          %v2259 = vld [vmem:[#allocation2 + $0x50] sm:$0xff]
          %v2260 = vld [vmem:[#allocation2 + $0x58] sm:$0xff]
          %v2261 = vld [vmem:[#allocation2 + $0x60] sm:$0xff]
          %v2262 = vld [vmem:[#allocation2 + $0x68] sm:$0xff]
          %v2263 = vld [vmem:[#allocation2 + $0x70] sm:$0xff]
          %v2264 = vld [vmem:[#allocation2 + $0x78] sm:$0xff]
          %v2265 = vld [vmem:[#allocation2 + $0x80] sm:$0xff]
          %v2266 = vld [vmem:[#allocation2 + $0x88] sm:$0xff]
          %v2267 = vld [vmem:[#allocation2 + $0x90] sm:$0xff]
          %v2268 = vld [vmem:[#allocation2 + $0x98] sm:$0xff]
          %v2269 = vld [vmem:[#allocation2 + $0xa0] sm:$0xff]
          %v2270 = vld [vmem:[#allocation2 + $0xa8] sm:$0xff]
          %v2271 = vld [vmem:[#allocation2 + $0xb0] sm:$0xff]
          %v2272 = vld [vmem:[#allocation2 + $0xb8] sm:$0xff]
          %v2273 = vld [vmem:[#allocation2 + $0xc0] sm:$0xff]
          %v2274 = vld [vmem:[#allocation2 + $0xc8] sm:$0xff]
          %v2275 = vld [vmem:[#allocation2 + $0xd0] sm:$0xff]
          %v2276 = vld [vmem:[#allocation2 + $0xd8] sm:$0xff]
          %v2277 = vld [vmem:[#allocation2 + $0xe0] sm:$0xff]
          %v2278 = vld [vmem:[#allocation2 + $0xe8] sm:$0xff]
          %v2279 = vld [vmem:[#allocation2 + $0xf0] sm:$0xff]
          %v2280 = vld [vmem:[#allocation2 + $0xf8] sm:$0xff]
          %v2281 = vmax.f32 %v2249, 0.0
          %v2282 = vmax.f32 %v2250, 0.0
          %v2283 = vmax.f32 %v2251, 0.0
          %v2284 = vmax.f32 %v2252, 0.0
          %v2285 = vmax.f32 %v2253, 0.0
          %v2286 = vmax.f32 %v2254, 0.0
          %v2287 = vmax.f32 %v2255, 0.0
          %v2288 = vmax.f32 %v2256, 0.0
          %v2289 = vmax.f32 %v2257, 0.0
          %v2290 = vmax.f32 %v2258, 0.0
          %v2291 = vmax.f32 %v2259, 0.0
          %v2292 = vmax.f32 %v2260, 0.0
          %v2293 = vmax.f32 %v2261, 0.0
          %v2294 = vmax.f32 %v2262, 0.0
          %v2295 = vmax.f32 %v2263, 0.0
          %v2296 = vmax.f32 %v2264, 0.0
          %v2297 = vmax.f32 %v2265, 0.0
          %v2298 = vmax.f32 %v2266, 0.0
          %v2299 = vmax.f32 %v2267, 0.0
          %v2300 = vmax.f32 %v2268, 0.0
          %v2301 = vmax.f32 %v2269, 0.0
          %v2302 = vmax.f32 %v2270, 0.0
          %v2303 = vmax.f32 %v2271, 0.0
          %v2304 = vmax.f32 %v2272, 0.0
          %v2305 = vmax.f32 %v2273, 0.0
          %v2306 = vmax.f32 %v2274, 0.0
          %v2307 = vmax.f32 %v2275, 0.0
          %v2308 = vmax.f32 %v2276, 0.0
          %v2309 = vmax.f32 %v2277, 0.0
          %v2310 = vmax.f32 %v2278, 0.0
          %v2311 = vmax.f32 %v2279, 0.0
          %v2312 = vmax.f32 %v2280, 0.0
          %v2313 = vpack.c.bf16 %v2282, %v2281
          %v2314 = vpack.c.bf16 %v2284, %v2283
          %v2315 = vpack.c.bf16 %v2286, %v2285
          %v2316 = vpack.c.bf16 %v2288, %v2287
          %v2317 = vpack.c.bf16 %v2290, %v2289
          %v2318 = vpack.c.bf16 %v2292, %v2291
          %v2319 = vpack.c.bf16 %v2294, %v2293
          %v2320 = vpack.c.bf16 %v2296, %v2295
          %v2321 = vpack.c.bf16 %v2298, %v2297
          %v2322 = vpack.c.bf16 %v2300, %v2299
          %v2323 = vpack.c.bf16 %v2302, %v2301
          %v2324 = vpack.c.bf16 %v2304, %v2303
          %v2325 = vpack.c.bf16 %v2306, %v2305
          %v2326 = vpack.c.bf16 %v2308, %v2307
          %v2327 = vpack.c.bf16 %v2310, %v2309
          %v2328 = vpack.c.bf16 %v2312, %v2311
          %v2345 = vunpack.c.l.b16 %v2313
          %v2346 = vunpack.c.h.b16 %v2313
          %v2347 = vunpack.c.l.b16 %v2314
          %v2348 = vunpack.c.h.b16 %v2314
          %v2349 = vunpack.c.l.b16 %v2315
          %v2350 = vunpack.c.h.b16 %v2315
          %v2351 = vunpack.c.l.b16 %v2316
          %v2352 = vunpack.c.h.b16 %v2316
          %v2353 = vunpack.c.l.b16 %v2317
          %v2354 = vunpack.c.h.b16 %v2317
          %v2355 = vunpack.c.l.b16 %v2318
          %v2356 = vunpack.c.h.b16 %v2318
          %v2357 = vunpack.c.l.b16 %v2319
          %v2358 = vunpack.c.h.b16 %v2319
          %v2359 = vunpack.c.l.b16 %v2320
          %v2360 = vunpack.c.h.b16 %v2320
          %v2361 = vunpack.c.l.b16 %v2321
          %v2362 = vunpack.c.h.b16 %v2321
          %v2363 = vunpack.c.l.b16 %v2322
          %v2364 = vunpack.c.h.b16 %v2322
          %v2365 = vunpack.c.l.b16 %v2323
          %v2366 = vunpack.c.h.b16 %v2323
          %v2367 = vunpack.c.l.b16 %v2324
          %v2368 = vunpack.c.h.b16 %v2324
          %v2369 = vunpack.c.l.b16 %v2325
          %v2370 = vunpack.c.h.b16 %v2325
          %v2371 = vunpack.c.l.b16 %v2326
          %v2372 = vunpack.c.h.b16 %v2326
          %v2373 = vunpack.c.l.b16 %v2327
          %v2374 = vunpack.c.h.b16 %v2327
          %v2375 = vunpack.c.l.b16 %v2328
          %v2376 = vunpack.c.h.b16 %v2328
          %v2377 = vpack.c.b16 %v2345, %v2345
          %v2378 = vpack.c.b16 %v2346, %v2346
          %v2379 = vpack.c.b16 %v2347, %v2347
          %v2380 = vpack.c.b16 %v2348, %v2348
          %v2381 = vpack.c.b16 %v2349, %v2349
          %v2382 = vpack.c.b16 %v2350, %v2350
          %v2383 = vpack.c.b16 %v2351, %v2351
          %v2384 = vpack.c.b16 %v2352, %v2352
          %v2385 = vpack.c.b16 %v2353, %v2353
          %v2386 = vpack.c.b16 %v2354, %v2354
          %v2387 = vpack.c.b16 %v2355, %v2355
          %v2388 = vpack.c.b16 %v2356, %v2356
          %v2389 = vpack.c.b16 %v2357, %v2357
          %v2390 = vpack.c.b16 %v2358, %v2358
          %v2391 = vpack.c.b16 %v2359, %v2359
          %v2392 = vpack.c.b16 %v2360, %v2360
          %v2393 = vpack.c.b16 %v2361, %v2361
          %v2394 = vpack.c.b16 %v2362, %v2362
          %v2395 = vpack.c.b16 %v2363, %v2363
          %v2396 = vpack.c.b16 %v2364, %v2364
          %v2397 = vpack.c.b16 %v2365, %v2365
          %v2398 = vpack.c.b16 %v2366, %v2366
          %v2399 = vpack.c.b16 %v2367, %v2367
          %v2400 = vpack.c.b16 %v2368, %v2368
          %v2401 = vpack.c.b16 %v2369, %v2369
          %v2402 = vpack.c.b16 %v2370, %v2370
          %v2403 = vpack.c.b16 %v2371, %v2371
          %v2404 = vpack.c.b16 %v2372, %v2372
          %v2405 = vpack.c.b16 %v2373, %v2373
          %v2406 = vpack.c.b16 %v2374, %v2374
          %v2407 = vpack.c.b16 %v2375, %v2375
          %v2408 = vpack.c.b16 %v2376, %v2376
          %2441 = vst [vmem:[%s269] sm:$0xf] %v2377
          %2442 = vst [vmem:[%s269 + $0x4] sm:$0xf] %v2378
          %2443 = vst [vmem:[%s269 + $0x8] sm:$0xf] %v2379
          %2444 = vst [vmem:[%s269 + $0xc] sm:$0xf] %v2380
          %2445 = vst [vmem:[%s269 + $0x10] sm:$0xf] %v2381
          %2446 = vst [vmem:[%s269 + $0x14] sm:$0xf] %v2382
          %2447 = vst [vmem:[%s269 + $0x18] sm:$0xf] %v2383
          %2448 = vst [vmem:[%s269 + $0x1c] sm:$0xf] %v2384
          %2449 = vst [vmem:[%s269 + $0x20] sm:$0xf] %v2385
          %2450 = vst [vmem:[%s269 + $0x24] sm:$0xf] %v2386
          %2451 = vst [vmem:[%s269 + $0x28] sm:$0xf] %v2387
          %2452 = vst [vmem:[%s269 + $0x2c] sm:$0xf] %v2388
          %2453 = vst [vmem:[%s269 + $0x30] sm:$0xf] %v2389
          %2454 = vst [vmem:[%s269 + $0x34] sm:$0xf] %v2390
          %2455 = vst [vmem:[%s269 + $0x38] sm:$0xf] %v2391
          %2456 = vst [vmem:[%s269 + $0x3c] sm:$0xf] %v2392
          %2457 = vst [vmem:[%s269 + $0x40] sm:$0xf] %v2393
          %2458 = vst [vmem:[%s269 + $0x44] sm:$0xf] %v2394
          %2459 = vst [vmem:[%s269 + $0x48] sm:$0xf] %v2395
          %2460 = vst [vmem:[%s269 + $0x4c] sm:$0xf] %v2396
          %2461 = vst [vmem:[%s269 + $0x50] sm:$0xf] %v2397
          %2462 = vst [vmem:[%s269 + $0x54] sm:$0xf] %v2398
          %2463 = vst [vmem:[%s269 + $0x58] sm:$0xf] %v2399
          %2464 = vst [vmem:[%s269 + $0x5c] sm:$0xf] %v2400
          %2465 = vst [vmem:[%s269 + $0x60] sm:$0xf] %v2401
          %2466 = vst [vmem:[%s269 + $0x64] sm:$0xf] %v2402
          %2467 = vst [vmem:[%s269 + $0x68] sm:$0xf] %v2403
          %2468 = vst [vmem:[%s269 + $0x6c] sm:$0xf] %v2404
          %2469 = vst [vmem:[%s269 + $0x70] sm:$0xf] %v2405
          %2470 = vst [vmem:[%s269 + $0x74] sm:$0xf] %v2406
          %2471 = vst [vmem:[%s269 + $0x78] sm:$0xf] %v2407
          %2472 = vst [vmem:[%s269 + $0x7c] sm:$0xf] %v2408
        $region48: #{tpu_custom_call.1} parent=31 // pred_fallthru
          _
        %s2473 = sand.u32 %s137, 1
        %s2474 = scalar_lea.sflag [#allocation8], %s2473
        %s2475 = sand.u32 %s137, 1
        %s2476 = smul.addr %s2475, 128
        %s2477 = scalar_lea.vmem [#allocation11], %s2476
        // Predicated region
        $region49: #{tpu_custom_call.1} parent=31 // pred_check
          %p2478 = pneg %p147
        $region50: #{tpu_custom_call.1} parent=31 // pred_check_branch
          %2480 = sbr.rel (%p2478) target = $region52
        $region51: #{tpu_custom_call.1} parent=31 // pred_region
          %s2482 = ssub.s32 2048, 2048
          %2483 = vsyncadd %s2474, %s2482
          %s2484 = smul.addr %s33, 32
          %s2485 = sadd.s32 %s34, %s2484
          %s2486 = smul.addr %s2485, 64
          %s2487 = scalar_lea.hbm %s4, %s2486
          %s2488 = sshll.u32 %s2477, 4
          %s2489 = int_to_ptr.vmem [resolvable:$true] %s2488
          %2494 = dma.vmem_to_hbm [thread:$0]  %s2489, 2048, %s2487, %s2474, 64, 64, 4
        $region52: #{tpu_custom_call.1} parent=31 // pred_fallthru
          _
      $region32: #{tpu_custom_call.1} parent=5 // pred_fallthru
        _
      %p2495 = scmp.le.s32.totalorder 2, %s23
      // Predicated region
      $region53: #{tpu_custom_call.1} parent=5 // pred_check
        %p2496 = pneg %p2495
      $region54: #{tpu_custom_call.1} parent=5 // pred_check_branch
        %2498 = sbr.rel (%p2496) target = $region56
      $region55: #{tpu_custom_call.1} parent=5 // pred_region
        %s2499 = ssub.s32 %s23, 2
        // Predicated region
        $region57: #{tpu_custom_call.1} parent=55 // pred_check
          %p2500 = pneg %p153
        $region58: #{tpu_custom_call.1} parent=55 // pred_check_branch
          %2502 = sbr.rel (%p2500) target = $region60
        $region59: #{tpu_custom_call.1} parent=55 // pred_region
          %s2503 = sand.u32 %s138, 1
          %s2504 = scalar_lea.sflag [#allocation8], %s2503
          %s2505 = sand.u32 %s138, 1
          %s2506 = smul.addr %s2505, 128
          %s2507 = scalar_lea.vmem [#allocation11], %s2506
          %2508 = dma.done %s2504, 2048
        $region60: #{tpu_custom_call.1} parent=55 // pred_fallthru
          _
      $region56: #{tpu_custom_call.1} parent=5 // pred_fallthru
        _
    $region6: #{tpu_custom_call.1} parent=1 // loop_footer
      %s27 = sadd.s32 1, %s23
    $region7: #{tpu_custom_call.1} parent=1 // loop_footer_branch
      %22 = sbr.rel target = $region3
    $region8: #{tpu_custom_call.1} parent=1 // loop_exit
      _
    %2509 = vsyncpa [#allocation7], 1
    %s2510 = scalar_lea.sflag [#allocation7], 1
    %2511 = vsyncpa %s2510, 1
    %2512 = vsyncpa [#allocation10], 1
    %s2513 = scalar_lea.sflag [#allocation10], 1
    %2514 = vsyncpa %s2513, 1
    %2515 = vsyncpa [#allocation8], 1
    %s2516 = scalar_lea.sflag [#allocation8], 1
    %2517 = vsyncpa %s2516, 1

</llo_original>
